<compile_context>
chip_gen: v7x
topology: tpu7x:2x2x1
jax: 0.10.0
libtpu: 0.0.40
codegen_flags: <defaults>
</compile_context>

<pallas_src>
import jax
import jax.numpy as jnp
from jax.experimental import pallas as pl
from jax.experimental.pallas import tpu as pltpu

N_FREQ = 257
IN_CHANNELS = N_FREQ
N_FILTERS = 512


def conv1xk_relu_kernel(x_ref, w_ref, o_ref):
    """One (tile_r, Wout, tile_o) output tile of the (1, KW) conv + ReLU.

    x_ref: (TR, W,    Cin) bf16 channels-last input rows (full W, full Cin)
    w_ref: (KW, Cin,  TO)  bf16 weight slice (sub-MB, effectively resident)
    o_ref: (TR, Wout, TO)  f32 output tile (lane-dense: TO multiple of 128)
    """
    kw = w_ref.shape[0]
    tr, wout, _ = o_ref.shape
    for r in range(tr):                       # static unroll (tile_r <= 8)
        xr = x_ref[r]                         # (W, Cin)
        acc = jnp.dot(xr[0:wout, :], w_ref[0],
                      preferred_element_type=jnp.float32)
        for k in range(1, kw):                # static unroll over filter taps
            acc += jnp.dot(xr[k:k + wout, :], w_ref[k],
                           preferred_element_type=jnp.float32)
        o_ref[r] = jnp.maximum(acc, 0.0).astype(o_ref.dtype)


def style_net_forward(x_nchw, weight_ocikw, *, tile_r=None, tile_o=None,
                      compute_dtype=jnp.bfloat16, out_dtype=jnp.float32):
    """Forward pass of style_net: Conv2d(Cin, Cout, (1, KW), bias=False) + ReLU.

    x_nchw       : (N, Cin, H, W)      -- PyTorch NCHW layout
    weight_ocikw : (Cout, Cin, 1, KW)  -- PyTorch Conv2d weight layout
    returns      : (N, Cout, H, W - KW + 1), out_dtype (default float32)
    """
    N, Cin, H, W = x_nchw.shape
    O, Cin2, KH, KW = weight_ocikw.shape
    assert KH == 1 and Cin2 == Cin
    Wout = W - KW + 1
    assert Wout >= 1
    R = N * H

    # --- layout plumbing only (x is read ONCE by the kernel; no im2col dup) ---
    # TODO(synk): if the surrounding model stays channels-last these transposes
    # (and the final one) disappear entirely.
    x_rwc = (jnp.transpose(x_nchw, (0, 2, 3, 1))
             .reshape(R, W, Cin).astype(compute_dtype))
    # weight: (O, Cin, 1, KW) -> (KW, Cin, O)
    w_kco = (jnp.transpose(weight_ocikw[:, :, 0, :], (2, 1, 0))
             .astype(compute_dtype))

    # --- tile selection ---
    if tile_r is None:
        # ~1024 output pixel-rows per grid step (per-step DMA >> 0.35us fixed
        # overhead), capped at 8 rows of static unroll, never exceeding R.
        tile_r = max(1, min(8, 1024 // max(Wout, 1), R))
    num_r_tiles = pl.cdiv(R, tile_r)
    if tile_o is None:
        # Guarantee >=2 grid steps so the "parallel" axes shard across both
        # TensorCores on v7x even for tiny inputs.
        tile_o = O if (num_r_tiles >= 2 or O % 256 != 0) else O // 2
    assert O % tile_o == 0 and (tile_o % 128 == 0 or tile_o == O)
    num_o_tiles = O // tile_o

    # Pad rows to a multiple of tile_r (padded rows are zeros -> relu(0)=0,
    # sliced off afterwards).
    R_pad = num_r_tiles * tile_r
    if R_pad != R:
        x_rwc = jnp.pad(x_rwc, ((0, R_pad - R), (0, 0), (0, 0)))

    bpe_in = jnp.dtype(compute_dtype).itemsize
    bpe_out = jnp.dtype(out_dtype).itemsize
    cost = pl.CostEstimate(
        flops=2 * R * Wout * KW * Cin * O,
        transcendentals=0,
        bytes_accessed=(R_pad * W * Cin * bpe_in          # x, read once
                        + KW * Cin * O * bpe_in           # weight
                        + R_pad * Wout * O * bpe_out))    # output

    out_rwo = pl.pallas_call(
        conv1xk_relu_kernel,
        out_shape=jax.ShapeDtypeStruct((R_pad, Wout, O), out_dtype),
        grid=(num_r_tiles, num_o_tiles),
        in_specs=[
            # Row tile of channels-last input: streams through the pipeline.
            pl.BlockSpec((tile_r, W, Cin), lambda i, j: (i, 0, 0)),
            # Small (KW, Cin, tile_o) weight slice.
            pl.BlockSpec((KW, Cin, tile_o), lambda i, j: (0, 0, j)),
        ],
        # Lane-dense output tile (tile_o is 256 or 512) -> unmasked stores.
        out_specs=pl.BlockSpec((tile_r, Wout, tile_o), lambda i, j: (i, 0, j)),
        compiler_params=pltpu.CompilerParams(
            dimension_semantics=("parallel", "parallel")),
        cost_estimate=cost,
    )(x_rwc, w_kco)

    # Back to PyTorch NCHW: (N, Cout, H, Wout).
    out = out_rwo[:R].reshape(N, H, Wout, O)
    return jnp.transpose(out, (0, 3, 1, 2))


def reference_forward(x_nchw, weight_ocikw):
    """Pure-JAX f32 reference (same semantics as torch Conv2d(1,KW) + ReLU)."""
    N, Cin, H, W = x_nchw.shape
    O, _, _, KW = weight_ocikw.shape
    Wout = W - KW + 1
    acc = jnp.zeros((N, O, H, Wout), jnp.float32)
    for k in range(KW):
        # out[n,o,h,w] += sum_c x[n,c,h,w+k] * W[o,c,0,k]
        acc = acc + jnp.einsum(
            "nchw,oc->nohw",
            x_nchw[:, :, :, k:k + Wout].astype(jnp.float32),
            weight_ocikw[:, :, 0, k].astype(jnp.float32),
        )
    return jnp.maximum(acc, 0.0)


if __name__ == "__main__":
    key = jax.random.PRNGKey(0)
    k_x, k_w = jax.random.split(key)

    # Small-but-consistent shapes: channel dims are fixed by the module
    # (IN_CHANNELS=257, N_FILTERS=512); spatial dims kept small.
    batch, H, W = 2, 1, 16
    hor_filter = 3

    x = jax.random.normal(k_x, (batch, IN_CHANNELS, H, W), dtype=jnp.float32)
    # Deterministic synthetic Conv2d weight, PyTorch layout (O, Cin, 1, KW).
    fan_in = IN_CHANNELS * 1 * hor_filter
    bound = 1.0 / jnp.sqrt(jnp.float32(fan_in))
    weight = jax.random.uniform(
        k_w, (N_FILTERS, IN_CHANNELS, 1, hor_filter),
        dtype=jnp.float32, minval=-bound, maxval=bound)

    out = style_net_forward(x, weight)
    out = jax.block_until_ready(out)

    ref = reference_forward(x, weight)
    assert out.shape == (batch, N_FILTERS, H, W - hor_filter + 1), out.shape
    # bf16 MXU inputs (f32 accumulation) -> loosened tolerance vs the f32 ref.
    # TODO(synk): numerics deviation from the all-f32 PyTorch module.
    assert jnp.allclose(out, ref, atol=2e-2, rtol=2e-2), \
        float(jnp.max(jnp.abs(out - ref)))

    print("KERNEL_OK")
</pallas_src>

<mosaic_0001>
module attributes {stable_mosaic.version = 11 : i64} {
  func.func @conv1xk_relu_kernel(%arg0: i32, %arg1: i32, %arg2: memref<2x16x257xbf16, #tpu.memory_space<vmem>>, %arg3: memref<3x257x256xbf16, #tpu.memory_space<vmem>>, %arg4: memref<2x14x256xf32, #tpu.memory_space<vmem>>) attributes {dimension_semantics = [#tpu.dimension_semantics<parallel>, #tpu.dimension_semantics<parallel>], iteration_bounds = array<i64: 1, 2>, scalar_prefetch = 0 : i64, scratch_operands = 0 : i64, tpu.core_type = #tpu.core_type<tc>, window_params = [{transform_indices = @transform_0, window_bounds = array<i64: 2, 16, 257>}, {transform_indices = @transform_1, window_bounds = array<i64: 3, 257, 256>}, {transform_indices = @transform_2, window_bounds = array<i64: 2, 14, 256>}]} {
    %c0 = arith.constant 0 : index
    %c0_0 = arith.constant 0 : index
    %c0_1 = arith.constant 0 : index
    %0 = vector.load %arg2[%c0, %c0_0, %c0_1] : memref<2x16x257xbf16, #tpu.memory_space<vmem>>, vector<1x16x257xbf16>
    %1 = vector.shape_cast %0 : vector<1x16x257xbf16> to vector<16x257xbf16>
    %2 = vector.extract_strided_slice %1 {offsets = [0, 0], sizes = [14, 257], strides = [1, 1]} : vector<16x257xbf16> to vector<14x257xbf16>
    %c0_2 = arith.constant 0 : index
    %c0_3 = arith.constant 0 : index
    %c0_4 = arith.constant 0 : index
    %3 = vector.load %arg3[%c0_2, %c0_3, %c0_4] : memref<3x257x256xbf16, #tpu.memory_space<vmem>>, vector<1x257x256xbf16>
    %4 = vector.shape_cast %3 : vector<1x257x256xbf16> to vector<257x256xbf16>
    %cst = arith.constant dense<0.000000e+00> : vector<14x256xf32>
    %5 = tpu.matmul %2, %4, %cst {dimension_numbers = #tpu.dot_dimension_numbers<[1], [0], [0], [1], [0, 0, 1, 1], [], []>} : vector<14x257xbf16>, vector<257x256xbf16>, vector<14x256xf32> -> vector<14x256xf32>
    %6 = vector.extract_strided_slice %1 {offsets = [1, 0], sizes = [14, 257], strides = [1, 1]} : vector<16x257xbf16> to vector<14x257xbf16>
    %c1 = arith.constant 1 : index
    %c0_5 = arith.constant 0 : index
    %c0_6 = arith.constant 0 : index
    %7 = vector.load %arg3[%c1, %c0_5, %c0_6] : memref<3x257x256xbf16, #tpu.memory_space<vmem>>, vector<1x257x256xbf16>
    %8 = vector.shape_cast %7 : vector<1x257x256xbf16> to vector<257x256xbf16>
    %cst_7 = arith.constant dense<0.000000e+00> : vector<14x256xf32>
    %9 = tpu.matmul %6, %8, %cst_7 {dimension_numbers = #tpu.dot_dimension_numbers<[1], [0], [0], [1], [0, 0, 1, 1], [], []>} : vector<14x257xbf16>, vector<257x256xbf16>, vector<14x256xf32> -> vector<14x256xf32>
    %10 = arith.addf %5, %9 : vector<14x256xf32>
    %11 = vector.extract_strided_slice %1 {offsets = [2, 0], sizes = [14, 257], strides = [1, 1]} : vector<16x257xbf16> to vector<14x257xbf16>
    %c2 = arith.constant 2 : index
    %c0_8 = arith.constant 0 : index
    %c0_9 = arith.constant 0 : index
    %12 = vector.load %arg3[%c2, %c0_8, %c0_9] : memref<3x257x256xbf16, #tpu.memory_space<vmem>>, vector<1x257x256xbf16>
    %13 = vector.shape_cast %12 : vector<1x257x256xbf16> to vector<257x256xbf16>
    %cst_10 = arith.constant dense<0.000000e+00> : vector<14x256xf32>
    %14 = tpu.matmul %11, %13, %cst_10 {dimension_numbers = #tpu.dot_dimension_numbers<[1], [0], [0], [1], [0, 0, 1, 1], [], []>} : vector<14x257xbf16>, vector<257x256xbf16>, vector<14x256xf32> -> vector<14x256xf32>
    %15 = arith.addf %10, %14 : vector<14x256xf32>
    %cst_11 = arith.constant 0.000000e+00 : f32
    %16 = vector.broadcast %cst_11 : f32 to vector<14x256xf32>
    %17 = arith.maximumf %15, %16 : vector<14x256xf32>
    %c0_12 = arith.constant 0 : index
    %c0_13 = arith.constant 0 : index
    %c0_14 = arith.constant 0 : index
    %18 = vector.load %arg4[%c0_12, %c0_13, %c0_14] : memref<2x14x256xf32, #tpu.memory_space<vmem>>, vector<1x14x256xf32>
    %19 = vector.shape_cast %18 : vector<1x14x256xf32> to vector<14x256xf32>
    %20 = vector.shape_cast %17 : vector<14x256xf32> to vector<1x14x256xf32>
    tpu.vector_store %arg4[%c0_12, %c0_13, %c0_14], %20 {strides = array<i32>} : memref<2x14x256xf32, #tpu.memory_space<vmem>>, vector<1x14x256xf32>,
    %c1_15 = arith.constant 1 : index
    %c0_16 = arith.constant 0 : index
    %c0_17 = arith.constant 0 : index
    %21 = vector.load %arg2[%c1_15, %c0_16, %c0_17] : memref<2x16x257xbf16, #tpu.memory_space<vmem>>, vector<1x16x257xbf16>
    %22 = vector.shape_cast %21 : vector<1x16x257xbf16> to vector<16x257xbf16>
    %23 = vector.extract_strided_slice %22 {offsets = [0, 0], sizes = [14, 257], strides = [1, 1]} : vector<16x257xbf16> to vector<14x257xbf16>
    %c0_18 = arith.constant 0 : index
    %c0_19 = arith.constant 0 : index
    %c0_20 = arith.constant 0 : index
    %24 = vector.load %arg3[%c0_18, %c0_19, %c0_20] : memref<3x257x256xbf16, #tpu.memory_space<vmem>>, vector<1x257x256xbf16>
    %25 = vector.shape_cast %24 : vector<1x257x256xbf16> to vector<257x256xbf16>
    %cst_21 = arith.constant dense<0.000000e+00> : vector<14x256xf32>
    %26 = tpu.matmul %23, %25, %cst_21 {dimension_numbers = #tpu.dot_dimension_numbers<[1], [0], [0], [1], [0, 0, 1, 1], [], []>} : vector<14x257xbf16>, vector<257x256xbf16>, vector<14x256xf32> -> vector<14x256xf32>
    %27 = vector.extract_strided_slice %22 {offsets = [1, 0], sizes = [14, 257], strides = [1, 1]} : vector<16x257xbf16> to vector<14x257xbf16>
    %c1_22 = arith.constant 1 : index
    %c0_23 = arith.constant 0 : index
    %c0_24 = arith.constant 0 : index
    %28 = vector.load %arg3[%c1_22, %c0_23, %c0_24] : memref<3x257x256xbf16, #tpu.memory_space<vmem>>, vector<1x257x256xbf16>
    %29 = vector.shape_cast %28 : vector<1x257x256xbf16> to vector<257x256xbf16>
    %cst_25 = arith.constant dense<0.000000e+00> : vector<14x256xf32>
    %30 = tpu.matmul %27, %29, %cst_25 {dimension_numbers = #tpu.dot_dimension_numbers<[1], [0], [0], [1], [0, 0, 1, 1], [], []>} : vector<14x257xbf16>, vector<257x256xbf16>, vector<14x256xf32> -> vector<14x256xf32>
    %31 = arith.addf %26, %30 : vector<14x256xf32>
    %32 = vector.extract_strided_slice %22 {offsets = [2, 0], sizes = [14, 257], strides = [1, 1]} : vector<16x257xbf16> to vector<14x257xbf16>
    %c2_26 = arith.constant 2 : index
    %c0_27 = arith.constant 0 : index
    %c0_28 = arith.constant 0 : index
    %33 = vector.load %arg3[%c2_26, %c0_27, %c0_28] : memref<3x257x256xbf16, #tpu.memory_space<vmem>>, vector<1x257x256xbf16>
    %34 = vector.shape_cast %33 : vector<1x257x256xbf16> to vector<257x256xbf16>
    %cst_29 = arith.constant dense<0.000000e+00> : vector<14x256xf32>
    %35 = tpu.matmul %32, %34, %cst_29 {dimension_numbers = #tpu.dot_dimension_numbers<[1], [0], [0], [1], [0, 0, 1, 1], [], []>} : vector<14x257xbf16>, vector<257x256xbf16>, vector<14x256xf32> -> vector<14x256xf32>
    %36 = arith.addf %31, %35 : vector<14x256xf32>
    %cst_30 = arith.constant 0.000000e+00 : f32
    %37 = vector.broadcast %cst_30 : f32 to vector<14x256xf32>
    %38 = arith.maximumf %36, %37 : vector<14x256xf32>
    %c1_31 = arith.constant 1 : index
    %c0_32 = arith.constant 0 : index
    %c0_33 = arith.constant 0 : index
    %39 = vector.load %arg4[%c1_31, %c0_32, %c0_33] : memref<2x14x256xf32, #tpu.memory_space<vmem>>, vector<1x14x256xf32>
    %40 = vector.shape_cast %39 : vector<1x14x256xf32> to vector<14x256xf32>
    %41 = vector.shape_cast %38 : vector<14x256xf32> to vector<1x14x256xf32>
    tpu.vector_store %arg4[%c1_31, %c0_32, %c0_33], %41 {strides = array<i32>} : memref<2x14x256xf32, #tpu.memory_space<vmem>>, vector<1x14x256xf32>,
    return
  }
  func.func @transform_0(%arg0: i32, %arg1: i32) -> (i32, i32, i32) {
    %c0_i32 = arith.constant 0 : i32
    %c0_i32_0 = arith.constant 0 : i32
    %c0_i32_1 = arith.constant 0 : i32
    return %arg0, %c0_i32, %c0_i32_0 : i32, i32, i32
  }
  func.func @transform_1(%arg0: i32, %arg1: i32) -> (i32, i32, i32) {
    %c0_i32 = arith.constant 0 : i32
    %c0_i32_0 = arith.constant 0 : i32
    %c0_i32_1 = arith.constant 0 : i32
    return %c0_i32, %c0_i32_0, %arg1 : i32, i32, i32
  }
  func.func @transform_2(%arg0: i32, %arg1: i32) -> (i32, i32, i32) {
    %c0_i32 = arith.constant 0 : i32
    %c0_i32_0 = arith.constant 0 : i32
    return %arg0, %c0_i32, %arg1 : i32, i32, i32
  }
}

</mosaic_0001>

<llo_original>
// kernel: tpu_custom_call.1
$region0: #{tpu_custom_call.1}
  #allocation0 [shape = 'u32[]', space=smem, size = 0x4, offset = 0x4, fixed_abs, tag = 'smem constant byte address 0x4 - core index']
  #allocation1 [shape = 'u32[144,128]{1,0:T(1,128)}', space=vmem, size = 0x12000, scoped, tag = 'internal scratch']
  %s0 = inlined_call_operand.hbm [shape: bf16[2,16,257], index: 0, kind: input, shape index: {}]
  %s1 = inlined_call_operand.hbm [shape: bf16[3,257,512], index: 1, kind: input, shape index: {}]
  %s2 = inlined_call_operand.vmem [shape: f32[2,14,512], index: 2, kind: output, shape index: {}]
  %s3 = sld [smem:[#allocation0]]
  $region68: #{tpu_custom_call.1} parent=0
    _
  %s5 = ssub.s32 1, %s3
  %s6 = scalar_select 0, %s5, %s3
  $region1: #{tpu_custom_call.1} parent=0
    #allocation2 [shape = 'u8[24576]{0}', space=vmem, size = 0x6000, scoped, tag = 'input window, operand 0, single buffered']
    #allocation3 [shape = 's32[2]{0}', space=sflag, size = 0x8, scoped, tag = 'scoped memory for tpu_custom_call.1']
    #allocation4 [shape = 'u8[811008]{0}', space=vmem, size = 0xc6000, scoped, tag = 'input window, operand 1']
    #allocation5 [shape = 's32[2]{0}', space=sflag, size = 0x8, scoped, tag = 'scoped memory for tpu_custom_call.1']
    #allocation6 [shape = 'u8[65536]{0}', space=vmem, size = 0x10000, scoped, tag = 'output window, operand 0']
    %7 = vsyncpa [#allocation3], 0
    %8 = vsyncpa [#allocation5], 0
    %s9 = scalar_lea.sflag [#allocation5], 1
    %10 = vsyncpa %s9, 0
    loop: start=0, step=1, limit=4
    $region2: #{tpu_custom_call.1} parent=1 // loop_pre_header
      _
    $region3: #{tpu_custom_call.1} parent=1 // loop_header
      %s12 = sphi 0, %s16
      %p13 = scmp.ge.s32.totalorder %s12, 4
      %s19 = sphi 0, %s31
      %s20 = sphi 0, %s27
      %s21 = sphi 0, %s19
      %s22 = sphi 0, %s20
      %s23 = sphi 0, %s21
      %s24 = sphi 0, %s22
      %s34 = sphi 0, %s36
      %s37 = sphi 0, %s34
      %s38 = sphi 0, %s37
      %s54 = sphi 0, %s38
      %s60 = sphi 0, %s62
      %s63 = sphi 0, %s60
      %s64 = sphi 0, %s63
      %s80 = sphi 0, %s64
      %s88 = sphi 0, %s90
      %s91 = sphi 0, %s88
      %s92 = sphi 0, %s91
      %s108 = sphi 0, %s92
    $region4: #{tpu_custom_call.1} parent=1 // loop_header_branch
      %15 = sbr.rel (%p13) target = $region8
    $region5: #{tpu_custom_call.1} parent=1 // loop_body
      %s17 = ssub.s32 %s12, 1
      %s18 = ssub.s32 %s12, 2
      %s25 = sadd.s32 1, %s20
      %p26 = scmp.ge.s32.totalorder %s25, 2
      %s27 = scalar_select %p26, 0, %s25
      %s28 = sadd.s32 1, %s19
      %s29 = scalar_select %p26, %s28, %s19
      %p30 = scmp.ge.s32.totalorder %s29, 1
      %s31 = scalar_select %p30, 0, %s29
      %s32 = ssub.s32 %s19, %s31
      %p33 = scmp.eq.s32.totalorder %s32, 0
      %s35 = sadd.s32 %s34, 1
      %s36 = scalar_select %p33, %s34, %s35
      %p39 = pneg %p33
      %p40 = scmp.eq.s32.totalorder %s12, 1
      %p41 = por %p39, %p40
      %p42 = scmp.ne.s32.totalorder %s34, %s37
      %p43 = scmp.eq.s32.totalorder %s12, 0
      %p44 = por %p42, %p43
      %p45 = scmp.ne.s32.totalorder %s34, %s37
      %p46 = scmp.eq.s32.totalorder %s17, 1
      %p47 = por %p45, %p46
      %p48 = scmp.ne.s32.totalorder %s37, %s38
      %p49 = scmp.eq.s32.totalorder %s17, 0
      %p50 = por %p48, %p49
      %p51 = scmp.ne.s32.totalorder %s37, %s38
      %p52 = scmp.eq.s32.totalorder %s18, 1
      %p53 = por %p51, %p52
      %p55 = scmp.ne.s32.totalorder %s38, %s54
      %p56 = scmp.eq.s32.totalorder %s18, 0
      %p57 = por %p55, %p56
      %s58 = ssub.s32 %s20, %s27
      %p59 = scmp.eq.s32.totalorder %s58, 0
      %s61 = sadd.s32 %s60, 1
      %s62 = scalar_select %p59, %s60, %s61
      %p65 = pneg %p59
      %p66 = scmp.eq.s32.totalorder %s12, 1
      %p67 = por %p65, %p66
      %p68 = scmp.ne.s32.totalorder %s60, %s63
      %p69 = scmp.eq.s32.totalorder %s12, 0
      %p70 = por %p68, %p69
      %p71 = scmp.ne.s32.totalorder %s60, %s63
      %p72 = scmp.eq.s32.totalorder %s17, 1
      %p73 = por %p71, %p72
      %p74 = scmp.ne.s32.totalorder %s63, %s64
      %p75 = scmp.eq.s32.totalorder %s17, 0
      %p76 = por %p74, %p75
      %p77 = scmp.ne.s32.totalorder %s63, %s64
      %p78 = scmp.eq.s32.totalorder %s18, 1
      %p79 = por %p77, %p78
      %p81 = scmp.ne.s32.totalorder %s64, %s80
      %p82 = scmp.eq.s32.totalorder %s18, 0
      %p83 = por %p81, %p82
      %s84 = ssub.s32 %s19, %s31
      %s85 = ssub.s32 %s20, %s27
      %s86 = sor.u32 %s84, %s85
      %p87 = scmp.eq.s32.totalorder %s86, 0
      %s89 = sadd.s32 %s88, 1
      %s90 = scalar_select %p87, %s88, %s89
      %p93 = pneg %p87
      %p94 = scmp.eq.s32.totalorder %s12, 1
      %p95 = por %p93, %p94
      %p96 = scmp.ne.s32.totalorder %s88, %s91
      %p97 = scmp.eq.s32.totalorder %s12, 0
      %p98 = por %p96, %p97
      %p99 = scmp.ne.s32.totalorder %s88, %s91
      %p100 = scmp.eq.s32.totalorder %s17, 1
      %p101 = por %p99, %p100
      %p102 = scmp.ne.s32.totalorder %s91, %s92
      %p103 = scmp.eq.s32.totalorder %s17, 0
      %p104 = por %p102, %p103
      %p105 = scmp.ne.s32.totalorder %s91, %s92
      %p106 = scmp.eq.s32.totalorder %s18, 1
      %p107 = por %p105, %p106
      %p109 = scmp.ne.s32.totalorder %s92, %s108
      %p110 = scmp.eq.s32.totalorder %s18, 0
      %p111 = por %p109, %p110
      %p112 = scmp.le.s32.totalorder 1, %s12
      %p113 = scmp.lt.s32.totalorder %s12, 3
      %p114 = pnand %p112, %p113
      %p115 = pneg %p114
      // Predicated region
      $region9: #{tpu_custom_call.1} parent=5 // pred_check
        _
      $region10: #{tpu_custom_call.1} parent=5 // pred_check_branch
        %117 = sbr.rel (%p114) target = $region12
      $region11: #{tpu_custom_call.1} parent=5 // pred_region
        %s118 = ssub.s32 %s12, 1
        // Predicated region
        $region13: #{tpu_custom_call.1} parent=11 // pred_check
          %p119 = pneg %p50
        $region14: #{tpu_custom_call.1} parent=11 // pred_check_branch
          %121 = sbr.rel (%p119) target = $region16
        $region15: #{tpu_custom_call.1} parent=11 // pred_region
          %s122 = smul.u32 2, %s21
          %s124 = ssub.s32 768, 768
          %125 = vsyncadd [#allocation3], %s124
          %s126 = smul.addr %s122, 6
          %s127 = smul.addr %s126, 64
          %s128 = scalar_lea.hbm %s0, %s127
          %s129 = sshll.u32 [#allocation2], 4
          %s130 = int_to_ptr.vmem [resolvable:$true] %s129
          %135 = dma.hbm_to_vmem [thread:$0]  %s128, 768, %s130, [#allocation3], 192, 192, 12
        $region16: #{tpu_custom_call.1} parent=11 // pred_fallthru
          _
      $region12: #{tpu_custom_call.1} parent=5 // pred_fallthru
        _
      %p136 = scmp.lt.s32.totalorder %s12, 2
      // Predicated region
      $region17: #{tpu_custom_call.1} parent=5 // pred_check
        %p137 = pneg %p136
      $region18: #{tpu_custom_call.1} parent=5 // pred_check_branch
        %139 = sbr.rel (%p137) target = $region20
      $region19: #{tpu_custom_call.1} parent=5 // pred_region
        // Predicated region
        $region21: #{tpu_custom_call.1} parent=19 // pred_check
          %p140 = pneg %p70
        $region22: #{tpu_custom_call.1} parent=19 // pred_check_branch
          %142 = sbr.rel (%p140) target = $region24
        $region23: #{tpu_custom_call.1} parent=19 // pred_region
          %s143 = sand.u32 %s60, 1
          %s144 = scalar_lea.sflag [#allocation5], %s143
          %s145 = sand.u32 %s60, 1
          %s146 = smul.addr %s145, 792
          %s147 = scalar_lea.vmem [#allocation4], %s146
          %s148 = smul.u32 2, %s20
          %s150 = ssub.s32 12672, 12672
          %151 = vsyncadd %s144, %s150
          %s152 = smul.addr %s148, 64
          %s153 = scalar_lea.hbm %s1, %s152
          %s154 = sshll.u32 %s147, 4
          %s155 = int_to_ptr.vmem [resolvable:$true] %s154
          %160 = dma.hbm_to_vmem [thread:$0]  %s153, 12672, %s155, %s144, 256, 128, 8
        $region24: #{tpu_custom_call.1} parent=19 // pred_fallthru
          _
      $region20: #{tpu_custom_call.1} parent=5 // pred_fallthru
        _
      %p161 = scmp.le.s32.totalorder 1, %s12
      %p162 = scmp.lt.s32.totalorder %s12, 3
      %p163 = pnand %p161, %p162
      %p164 = pneg %p163
      // Predicated region
      $region25: #{tpu_custom_call.1} parent=5 // pred_check
        _
      $region26: #{tpu_custom_call.1} parent=5 // pred_check_branch
        %166 = sbr.rel (%p163) target = $region28
      $region27: #{tpu_custom_call.1} parent=5 // pred_region
        %s167 = ssub.s32 %s12, 1
        // Predicated region
        $region29: #{tpu_custom_call.1} parent=27 // pred_check
          %p168 = pneg %p50
        $region30: #{tpu_custom_call.1} parent=27 // pred_check_branch
          %170 = sbr.rel (%p168) target = $region32
        $region31: #{tpu_custom_call.1} parent=27 // pred_region
          %171 = dma.done [#allocation3], 768
        $region32: #{tpu_custom_call.1} parent=27 // pred_fallthru
          _
        %s172 = sand.u32 %s63, 1
        %s173 = scalar_lea.sflag [#allocation5], %s172
        %s174 = sand.u32 %s63, 1
        %s175 = smul.addr %s174, 792
        %s176 = scalar_lea.vmem [#allocation4], %s175
        // Predicated region
        $region33: #{tpu_custom_call.1} parent=27 // pred_check
          %p177 = pneg %p76
        $region34: #{tpu_custom_call.1} parent=27 // pred_check_branch
          %179 = sbr.rel (%p177) target = $region36
        $region35: #{tpu_custom_call.1} parent=27 // pred_region
          %180 = dma.done %s173, 12672
        $region36: #{tpu_custom_call.1} parent=27 // pred_fallthru
          _
        %p181 = pneg %p50
        %p182 = pneg %p47
        %s183 = sand.u32 %s63, 1
        %s184 = scalar_lea.sflag [#allocation5], %s183
        %s185 = sand.u32 %s63, 1
        %s186 = smul.addr %s185, 792
        %s187 = scalar_lea.vmem [#allocation4], %s186
        %p188 = pneg %p76
        %p189 = pneg %p73
        %p190 = pneg %p104
        %p191 = pneg %p101
        %s192 = sand.u32 %s91, 1
        %s193 = sand.u32 %s91, 1
        %s194 = smul.addr %s193, 64
        %s195 = scalar_lea.vmem [#allocation6], %s194
        %s196 = smul.u32 2, %s21
        %s197 = smul.u32 2, %s22
        %s198 = smul.u32 2, %s21
        %s199 = smul.u32 2, %s22
        %v201 = vld [vmem:[#allocation2] sm:$0xff]
        %v202 = vld [vmem:[#allocation2 + $0x8] sm:$0xf]
        %v203 = vld [vmem:[#allocation2 + $0xc] sm:$0xff]
        %v204 = vld [vmem:[#allocation2 + $0x14] sm:$0xf]
        %v205 = vld [vmem:[%s176] sm:$0xff]
        %v206 = vld [vmem:[%s176 + $0x8] sm:$0xff]
        %v207 = vld [vmem:[%s176 + $0x10] sm:$0xff]
        %v208 = vld [vmem:[%s176 + $0x18] sm:$0xff]
        %v209 = vld [vmem:[%s176 + $0x20] sm:$0xff]
        %v210 = vld [vmem:[%s176 + $0x28] sm:$0xff]
        %v211 = vld [vmem:[%s176 + $0x30] sm:$0xff]
        %v212 = vld [vmem:[%s176 + $0x38] sm:$0xff]
        %v213 = vld [vmem:[%s176 + $0x40] sm:$0xff]
        %v214 = vld [vmem:[%s176 + $0x48] sm:$0xff]
        %v215 = vld [vmem:[%s176 + $0x50] sm:$0xff]
        %v216 = vld [vmem:[%s176 + $0x58] sm:$0xff]
        %v217 = vld [vmem:[%s176 + $0x60] sm:$0xff]
        %v218 = vld [vmem:[%s176 + $0x68] sm:$0xff]
        %v219 = vld [vmem:[%s176 + $0x70] sm:$0xff]
        %v220 = vld [vmem:[%s176 + $0x78] sm:$0xff]
        %v221 = vld [vmem:[%s176 + $0x80] sm:$0xff]
        %v222 = vld [vmem:[%s176 + $0x88] sm:$0xff]
        %v223 = vld [vmem:[%s176 + $0x90] sm:$0xff]
        %v224 = vld [vmem:[%s176 + $0x98] sm:$0xff]
        %v225 = vld [vmem:[%s176 + $0xa0] sm:$0xff]
        %v226 = vld [vmem:[%s176 + $0xa8] sm:$0xff]
        %v227 = vld [vmem:[%s176 + $0xb0] sm:$0xff]
        %v228 = vld [vmem:[%s176 + $0xb8] sm:$0xff]
        %v229 = vld [vmem:[%s176 + $0xc0] sm:$0xff]
        %v230 = vld [vmem:[%s176 + $0xc8] sm:$0xff]
        %v231 = vld [vmem:[%s176 + $0xd0] sm:$0xff]
        %v232 = vld [vmem:[%s176 + $0xd8] sm:$0xff]
        %v233 = vld [vmem:[%s176 + $0xe0] sm:$0xff]
        %v234 = vld [vmem:[%s176 + $0xe8] sm:$0xff]
        %v235 = vld [vmem:[%s176 + $0xf0] sm:$0xff]
        %v236 = vld [vmem:[%s176 + $0xf8] sm:$0xff]
        %v237 = vld [vmem:[%s176 + $0x100] sm:$0x11]
        %s238 = scalar_lea.vmem %s176, 264 [#allocation4]
        %v239 = vld [vmem:[%s238] sm:$0xff]
        %v240 = vld [vmem:[%s238 + $0x8] sm:$0xff]
        %v241 = vld [vmem:[%s238 + $0x10] sm:$0xff]
        %v242 = vld [vmem:[%s238 + $0x18] sm:$0xff]
        %v243 = vld [vmem:[%s238 + $0x20] sm:$0xff]
        %v244 = vld [vmem:[%s238 + $0x28] sm:$0xff]
        %v245 = vld [vmem:[%s238 + $0x30] sm:$0xff]
        %v246 = vld [vmem:[%s238 + $0x38] sm:$0xff]
        %v247 = vld [vmem:[%s238 + $0x40] sm:$0xff]
        %v248 = vld [vmem:[%s238 + $0x48] sm:$0xff]
        %v249 = vld [vmem:[%s238 + $0x50] sm:$0xff]
        %v250 = vld [vmem:[%s238 + $0x58] sm:$0xff]
        %v251 = vld [vmem:[%s238 + $0x60] sm:$0xff]
        %v252 = vld [vmem:[%s238 + $0x68] sm:$0xff]
        %v253 = vld [vmem:[%s238 + $0x70] sm:$0xff]
        %v254 = vld [vmem:[%s238 + $0x78] sm:$0xff]
        %v255 = vld [vmem:[%s238 + $0x80] sm:$0xff]
        %v256 = vld [vmem:[%s238 + $0x88] sm:$0xff]
        %v257 = vld [vmem:[%s238 + $0x90] sm:$0xff]
        %v258 = vld [vmem:[%s238 + $0x98] sm:$0xff]
        %v259 = vld [vmem:[%s238 + $0xa0] sm:$0xff]
        %v260 = vld [vmem:[%s238 + $0xa8] sm:$0xff]
        %v261 = vld [vmem:[%s238 + $0xb0] sm:$0xff]
        %v262 = vld [vmem:[%s238 + $0xb8] sm:$0xff]
        %v263 = vld [vmem:[%s238 + $0xc0] sm:$0xff]
        %v264 = vld [vmem:[%s238 + $0xc8] sm:$0xff]
        %v265 = vld [vmem:[%s238 + $0xd0] sm:$0xff]
        %v266 = vld [vmem:[%s238 + $0xd8] sm:$0xff]
        %v267 = vld [vmem:[%s238 + $0xe0] sm:$0xff]
        %v268 = vld [vmem:[%s238 + $0xe8] sm:$0xff]
        %v269 = vld [vmem:[%s238 + $0xf0] sm:$0xff]
        %v270 = vld [vmem:[%s238 + $0xf8] sm:$0xff]
        %v271 = vld [vmem:[%s238 + $0x100] sm:$0x11]
        %v276 = vunpack.c.l.b16 %v201
        %v277 = vunpack.c.h.b16 %v201
        %v278 = vunpack.c.l.b16 %v202
        %v279 = vunpack.c.l.b16 %v203
        %v280 = vunpack.c.h.b16 %v203
        %v281 = vunpack.c.l.b16 %v204
        %v282 = vpack.c.b16 %v279, %v276
        %v283 = vpack.c.b16 %v280, %v277
        %v284 = vpack.c.b16 %v281, %v278
        %v286 = vshrl.u32 %v282, 16
        %v288 = vshll.u32 %v282, 16
        %v290 = vrot.slane %v288, 1
        %v291 = vor.u32 %v286, %v290
        %v293 = vshrl.u32 %v283, 16
        %v295 = vshll.u32 %v283, 16
        %v297 = vrot.slane %v295, 1
        %v298 = vor.u32 %v293, %v297
        %v300 = vshrl.u32 %v284, 16
        %v302 = vshll.u32 %v284, 16
        %v304 = vrot.slane %v302, 1
        %v305 = vor.u32 %v300, %v304
        %v341 = vunpack.c.l.b16 %v239
        %v342 = vunpack.c.h.b16 %v239
        %v343 = vunpack.c.l.b16 %v240
        %v344 = vunpack.c.h.b16 %v240
        %v345 = vunpack.c.l.b16 %v241
        %v346 = vunpack.c.h.b16 %v241
        %v347 = vunpack.c.l.b16 %v242
        %v348 = vunpack.c.h.b16 %v242
        %v349 = vunpack.c.l.b16 %v243
        %v350 = vunpack.c.h.b16 %v243
        %v351 = vunpack.c.l.b16 %v244
        %v352 = vunpack.c.h.b16 %v244
        %v353 = vunpack.c.l.b16 %v245
        %v354 = vunpack.c.h.b16 %v245
        %v355 = vunpack.c.l.b16 %v246
        %v356 = vunpack.c.h.b16 %v246
        %v357 = vunpack.c.l.b16 %v247
        %v358 = vunpack.c.h.b16 %v247
        %v359 = vunpack.c.l.b16 %v248
        %v360 = vunpack.c.h.b16 %v248
        %v361 = vunpack.c.l.b16 %v249
        %v362 = vunpack.c.h.b16 %v249
        %v363 = vunpack.c.l.b16 %v250
        %v364 = vunpack.c.h.b16 %v250
        %v365 = vunpack.c.l.b16 %v251
        %v366 = vunpack.c.h.b16 %v251
        %v367 = vunpack.c.l.b16 %v252
        %v368 = vunpack.c.h.b16 %v252
        %v369 = vunpack.c.l.b16 %v253
        %v370 = vunpack.c.h.b16 %v253
        %v371 = vunpack.c.l.b16 %v254
        %v372 = vunpack.c.h.b16 %v254
        %v373 = vunpack.c.l.b16 %v255
        %v374 = vunpack.c.h.b16 %v255
        %v375 = vunpack.c.l.b16 %v256
        %v376 = vunpack.c.h.b16 %v256
        %v377 = vunpack.c.l.b16 %v257
        %v378 = vunpack.c.h.b16 %v257
        %v379 = vunpack.c.l.b16 %v258
        %v380 = vunpack.c.h.b16 %v258
        %v381 = vunpack.c.l.b16 %v259
        %v382 = vunpack.c.h.b16 %v259
        %v383 = vunpack.c.l.b16 %v260
        %v384 = vunpack.c.h.b16 %v260
        %v385 = vunpack.c.l.b16 %v261
        %v386 = vunpack.c.h.b16 %v261
        %v387 = vunpack.c.l.b16 %v262
        %v388 = vunpack.c.h.b16 %v262
        %v389 = vunpack.c.l.b16 %v263
        %v390 = vunpack.c.h.b16 %v263
        %v391 = vunpack.c.l.b16 %v264
        %v392 = vunpack.c.h.b16 %v264
        %v393 = vunpack.c.l.b16 %v265
        %v394 = vunpack.c.h.b16 %v265
        %v395 = vunpack.c.l.b16 %v266
        %v396 = vunpack.c.h.b16 %v266
        %v397 = vunpack.c.l.b16 %v267
        %v398 = vunpack.c.h.b16 %v267
        %v399 = vunpack.c.l.b16 %v268
        %v400 = vunpack.c.h.b16 %v268
        %v401 = vunpack.c.l.b16 %v269
        %v402 = vunpack.c.h.b16 %v269
        %v403 = vunpack.c.l.b16 %v270
        %v404 = vunpack.c.h.b16 %v270
        %v405 = vunpack.c.l.b16 %v271
        %v406 = vunpack.c.h.b16 %v271
        %v407 = vpack.c.b16 %v343, %v341
        %v408 = vpack.c.b16 %v344, %v342
        %v409 = vpack.c.b16 %v347, %v345
        %v410 = vpack.c.b16 %v348, %v346
        %v411 = vpack.c.b16 %v351, %v349
        %v412 = vpack.c.b16 %v352, %v350
        %v413 = vpack.c.b16 %v355, %v353
        %v414 = vpack.c.b16 %v356, %v354
        %v415 = vpack.c.b16 %v359, %v357
        %v416 = vpack.c.b16 %v360, %v358
        %v417 = vpack.c.b16 %v363, %v361
        %v418 = vpack.c.b16 %v364, %v362
        %v419 = vpack.c.b16 %v367, %v365
        %v420 = vpack.c.b16 %v368, %v366
        %v421 = vpack.c.b16 %v371, %v369
        %v422 = vpack.c.b16 %v372, %v370
        %v423 = vpack.c.b16 %v375, %v373
        %v424 = vpack.c.b16 %v376, %v374
        %v425 = vpack.c.b16 %v379, %v377
        %v426 = vpack.c.b16 %v380, %v378
        %v427 = vpack.c.b16 %v383, %v381
        %v428 = vpack.c.b16 %v384, %v382
        %v429 = vpack.c.b16 %v387, %v385
        %v430 = vpack.c.b16 %v388, %v386
        %v431 = vpack.c.b16 %v391, %v389
        %v432 = vpack.c.b16 %v392, %v390
        %v433 = vpack.c.b16 %v395, %v393
        %v434 = vpack.c.b16 %v396, %v394
        %v435 = vpack.c.b16 %v399, %v397
        %v436 = vpack.c.b16 %v400, %v398
        %v437 = vpack.c.b16 %v403, %v401
        %v438 = vpack.c.b16 %v404, %v402
        %v439 = vpack.c.b16 %v405, %v405
        %v440 = vpack.c.b16 %v406, %v406
        %vm473 = vcmask 7168
        %v475 = vsel %vm473, %v305, 0
        %vm477 = vcmask 1040384
        %v478 = vsel 0, 4294967295, 65535
        %v479 = vsel %vm477, %v478, 0
        %v481 = vand.u32 %v439, %v479
        %v484 = vand.u32 %v440, %v479
        %486 = vmatprep.subr.bf16.mxu0 %v408
        %487 = vmatpush1.bf16.msra.mxu0 %v407
        %488 = vmatprep.subr.bf16.mxu0 %v410
        %489 = vmatpush1.bf16.msra.mxu0 %v409
        %490 = vmatprep.subr.bf16.mxu0 %v412
        %491 = vmatpush1.bf16.msra.mxu0 %v411
        %492 = vmatprep.subr.bf16.mxu0 %v414
        %493 = vmatpush1.bf16.msra.mxu0 %v413
        %494 = vmatprep.subr.bf16.mxu0 %v416
        %495 = vmatpush1.bf16.msra.mxu0 %v415
        %496 = vmatprep.subr.bf16.mxu0 %v418
        %497 = vmatpush1.bf16.msra.mxu0 %v417
        %498 = vmatprep.subr.bf16.mxu0 %v420
        %499 = vmatpush1.bf16.msra.mxu0 %v419
        %500 = vmatprep.subr.bf16.mxu0 %v422
        %501 = vmatpush1.bf16.msra.mxu0 %v421
        %502 = vmatprep.subr.bf16.mxu0 %v424
        %503 = vmatpush1.bf16.msra.mxu0 %v423
        %504 = vmatprep.subr.bf16.mxu0 %v426
        %505 = vmatpush1.bf16.msra.mxu0 %v425
        %506 = vmatprep.subr.bf16.mxu0 %v428
        %507 = vmatpush1.bf16.msra.mxu0 %v427
        %508 = vmatprep.subr.bf16.mxu0 %v430
        %509 = vmatpush1.bf16.msra.mxu0 %v429
        %510 = vmatprep.subr.bf16.mxu0 %v432
        %511 = vmatpush1.bf16.msra.mxu0 %v431
        %512 = vmatprep.subr.bf16.mxu0 %v434
        %513 = vmatpush1.bf16.msra.mxu0 %v433
        %514 = vmatprep.subr.bf16.mxu0 %v436
        %515 = vmatpush1.bf16.msra.mxu0 %v435
        %516 = vmatprep.subr.bf16.mxu0 %v438
        %517 = vmatpush1.bf16.msra.mxu0 %v437
        %518 = vmatprep.mubr.bf16.mxu0 %v298
        %519 = vmatmul.mubr.bf16.gmra.mrb[0].mxu0 %v291
        %v520 = vpop.f32.mrb[0].mxu0
        %v521 = vadd.f32 0.0, %v520
        %v522 = vpop.f32.mrb[0].mxu0
        %v523 = vadd.f32 0.0, %v522
        %v524 = vpop.f32.mrb[0].mxu0
        %v525 = vadd.f32 0.0, %v524
        %v526 = vpop.f32.mrb[0].mxu0
        %v527 = vadd.f32 0.0, %v526
        %528 = vdwg.mxu0
        %529 = vmatprep.subr.bf16.mxu0 %v484
        %530 = vmatpush1.bf16.msra.mxu0 %v481
        %531 = vmatprep.subr.bf16.mxu0 0
        %532 = vmatpush1.bf16.msra.mxu0 0
        %533 = vmatprep.subr.bf16.mxu0 0
        %534 = vmatpush1.bf16.msra.mxu0 0
        %535 = vmatprep.subr.bf16.mxu0 0
        %536 = vmatpush1.bf16.msra.mxu0 0
        %537 = vmatprep.subr.bf16.mxu0 0
        %538 = vmatpush1.bf16.msra.mxu0 0
        %539 = vmatprep.subr.bf16.mxu0 0
        %540 = vmatpush1.bf16.msra.mxu0 0
        %541 = vmatprep.subr.bf16.mxu0 0
        %542 = vmatpush1.bf16.msra.mxu0 0
        %543 = vmatprep.subr.bf16.mxu0 0
        %544 = vmatpush1.bf16.msra.mxu0 0
        %545 = vmatprep.subr.bf16.mxu0 0
        %546 = vmatpush1.bf16.msra.mxu0 0
        %547 = vmatprep.subr.bf16.mxu0 0
        %548 = vmatpush1.bf16.msra.mxu0 0
        %549 = vmatprep.subr.bf16.mxu0 0
        %550 = vmatpush1.bf16.msra.mxu0 0
        %551 = vmatprep.subr.bf16.mxu0 0
        %552 = vmatpush1.bf16.msra.mxu0 0
        %553 = vmatprep.subr.bf16.mxu0 0
        %554 = vmatpush1.bf16.msra.mxu0 0
        %555 = vmatprep.subr.bf16.mxu0 0
        %556 = vmatpush1.bf16.msra.mxu0 0
        %557 = vmatprep.subr.bf16.mxu0 0
        %558 = vmatpush1.bf16.msra.mxu0 0
        %559 = vmatprep.subr.bf16.mxu0 0
        %560 = vmatpush1.bf16.msra.mxu0 0
        %561 = vmatprep.mubr.bf16.mxu0 0
        %562 = vmatmul.mubr.bf16.gmra.mrb[0].mxu0 %v475
        %v563 = vpop.f32.mrb[0].mxu0
        %v564 = vadd.f32 %v521, %v563
        %v565 = vpop.f32.mrb[0].mxu0
        %v566 = vadd.f32 %v523, %v565
        %v567 = vpop.f32.mrb[0].mxu0
        %v568 = vadd.f32 %v525, %v567
        %v569 = vpop.f32.mrb[0].mxu0
        %v570 = vadd.f32 %v527, %v569
        %571 = vdwg.mxu0
        %v607 = vunpack.c.l.b16 %v205
        %v608 = vunpack.c.h.b16 %v205
        %v609 = vunpack.c.l.b16 %v206
        %v610 = vunpack.c.h.b16 %v206
        %v611 = vunpack.c.l.b16 %v207
        %v612 = vunpack.c.h.b16 %v207
        %v613 = vunpack.c.l.b16 %v208
        %v614 = vunpack.c.h.b16 %v208
        %v615 = vunpack.c.l.b16 %v209
        %v616 = vunpack.c.h.b16 %v209
        %v617 = vunpack.c.l.b16 %v210
        %v618 = vunpack.c.h.b16 %v210
        %v619 = vunpack.c.l.b16 %v211
        %v620 = vunpack.c.h.b16 %v211
        %v621 = vunpack.c.l.b16 %v212
        %v622 = vunpack.c.h.b16 %v212
        %v623 = vunpack.c.l.b16 %v213
        %v624 = vunpack.c.h.b16 %v213
        %v625 = vunpack.c.l.b16 %v214
        %v626 = vunpack.c.h.b16 %v214
        %v627 = vunpack.c.l.b16 %v215
        %v628 = vunpack.c.h.b16 %v215
        %v629 = vunpack.c.l.b16 %v216
        %v630 = vunpack.c.h.b16 %v216
        %v631 = vunpack.c.l.b16 %v217
        %v632 = vunpack.c.h.b16 %v217
        %v633 = vunpack.c.l.b16 %v218
        %v634 = vunpack.c.h.b16 %v218
        %v635 = vunpack.c.l.b16 %v219
        %v636 = vunpack.c.h.b16 %v219
        %v637 = vunpack.c.l.b16 %v220
        %v638 = vunpack.c.h.b16 %v220
        %v639 = vunpack.c.l.b16 %v221
        %v640 = vunpack.c.h.b16 %v221
        %v641 = vunpack.c.l.b16 %v222
        %v642 = vunpack.c.h.b16 %v222
        %v643 = vunpack.c.l.b16 %v223
        %v644 = vunpack.c.h.b16 %v223
        %v645 = vunpack.c.l.b16 %v224
        %v646 = vunpack.c.h.b16 %v224
        %v647 = vunpack.c.l.b16 %v225
        %v648 = vunpack.c.h.b16 %v225
        %v649 = vunpack.c.l.b16 %v226
        %v650 = vunpack.c.h.b16 %v226
        %v651 = vunpack.c.l.b16 %v227
        %v652 = vunpack.c.h.b16 %v227
        %v653 = vunpack.c.l.b16 %v228
        %v654 = vunpack.c.h.b16 %v228
        %v655 = vunpack.c.l.b16 %v229
        %v656 = vunpack.c.h.b16 %v229
        %v657 = vunpack.c.l.b16 %v230
        %v658 = vunpack.c.h.b16 %v230
        %v659 = vunpack.c.l.b16 %v231
        %v660 = vunpack.c.h.b16 %v231
        %v661 = vunpack.c.l.b16 %v232
        %v662 = vunpack.c.h.b16 %v232
        %v663 = vunpack.c.l.b16 %v233
        %v664 = vunpack.c.h.b16 %v233
        %v665 = vunpack.c.l.b16 %v234
        %v666 = vunpack.c.h.b16 %v234
        %v667 = vunpack.c.l.b16 %v235
        %v668 = vunpack.c.h.b16 %v235
        %v669 = vunpack.c.l.b16 %v236
        %v670 = vunpack.c.h.b16 %v236
        %v671 = vunpack.c.l.b16 %v237
        %v672 = vunpack.c.h.b16 %v237
        %v673 = vpack.c.b16 %v609, %v607
        %v674 = vpack.c.b16 %v610, %v608
        %v675 = vpack.c.b16 %v613, %v611
        %v676 = vpack.c.b16 %v614, %v612
        %v677 = vpack.c.b16 %v617, %v615
        %v678 = vpack.c.b16 %v618, %v616
        %v679 = vpack.c.b16 %v621, %v619
        %v680 = vpack.c.b16 %v622, %v620
        %v681 = vpack.c.b16 %v625, %v623
        %v682 = vpack.c.b16 %v626, %v624
        %v683 = vpack.c.b16 %v629, %v627
        %v684 = vpack.c.b16 %v630, %v628
        %v685 = vpack.c.b16 %v633, %v631
        %v686 = vpack.c.b16 %v634, %v632
        %v687 = vpack.c.b16 %v637, %v635
        %v688 = vpack.c.b16 %v638, %v636
        %v689 = vpack.c.b16 %v641, %v639
        %v690 = vpack.c.b16 %v642, %v640
        %v691 = vpack.c.b16 %v645, %v643
        %v692 = vpack.c.b16 %v646, %v644
        %v693 = vpack.c.b16 %v649, %v647
        %v694 = vpack.c.b16 %v650, %v648
        %v695 = vpack.c.b16 %v653, %v651
        %v696 = vpack.c.b16 %v654, %v652
        %v697 = vpack.c.b16 %v657, %v655
        %v698 = vpack.c.b16 %v658, %v656
        %v699 = vpack.c.b16 %v661, %v659
        %v700 = vpack.c.b16 %v662, %v660
        %v701 = vpack.c.b16 %v665, %v663
        %v702 = vpack.c.b16 %v666, %v664
        %v703 = vpack.c.b16 %v669, %v667
        %v704 = vpack.c.b16 %v670, %v668
        %v705 = vpack.c.b16 %v671, %v671
        %v706 = vpack.c.b16 %v672, %v672
        %v739 = vsel %vm473, %v284, 0
        %v742 = vand.u32 %v705, %v479
        %v745 = vand.u32 %v706, %v479
        %747 = vmatprep.subr.bf16.mxu0 %v674
        %748 = vmatpush1.bf16.msra.mxu0 %v673
        %749 = vmatprep.subr.bf16.mxu0 %v676
        %750 = vmatpush1.bf16.msra.mxu0 %v675
        %751 = vmatprep.subr.bf16.mxu0 %v678
        %752 = vmatpush1.bf16.msra.mxu0 %v677
        %753 = vmatprep.subr.bf16.mxu0 %v680
        %754 = vmatpush1.bf16.msra.mxu0 %v679
        %755 = vmatprep.subr.bf16.mxu0 %v682
        %756 = vmatpush1.bf16.msra.mxu0 %v681
        %757 = vmatprep.subr.bf16.mxu0 %v684
        %758 = vmatpush1.bf16.msra.mxu0 %v683
        %759 = vmatprep.subr.bf16.mxu0 %v686
        %760 = vmatpush1.bf16.msra.mxu0 %v685
        %761 = vmatprep.subr.bf16.mxu0 %v688
        %762 = vmatpush1.bf16.msra.mxu0 %v687
        %763 = vmatprep.subr.bf16.mxu0 %v690
        %764 = vmatpush1.bf16.msra.mxu0 %v689
        %765 = vmatprep.subr.bf16.mxu0 %v692
        %766 = vmatpush1.bf16.msra.mxu0 %v691
        %767 = vmatprep.subr.bf16.mxu0 %v694
        %768 = vmatpush1.bf16.msra.mxu0 %v693
        %769 = vmatprep.subr.bf16.mxu0 %v696
        %770 = vmatpush1.bf16.msra.mxu0 %v695
        %771 = vmatprep.subr.bf16.mxu0 %v698
        %772 = vmatpush1.bf16.msra.mxu0 %v697
        %773 = vmatprep.subr.bf16.mxu0 %v700
        %774 = vmatpush1.bf16.msra.mxu0 %v699
        %775 = vmatprep.subr.bf16.mxu0 %v702
        %776 = vmatpush1.bf16.msra.mxu0 %v701
        %777 = vmatprep.subr.bf16.mxu0 %v704
        %778 = vmatpush1.bf16.msra.mxu0 %v703
        %779 = vmatprep.mubr.bf16.mxu0 %v283
        %780 = vmatmul.mubr.bf16.gmra.mrb[0].mxu0 %v282
        %v781 = vpop.f32.mrb[0].mxu0
        %v782 = vadd.f32 %v564, %v781
        %v783 = vpop.f32.mrb[0].mxu0
        %v784 = vadd.f32 %v566, %v783
        %v785 = vpop.f32.mrb[0].mxu0
        %v786 = vadd.f32 %v568, %v785
        %v787 = vpop.f32.mrb[0].mxu0
        %v788 = vadd.f32 %v570, %v787
        %789 = vdwg.mxu0
        %790 = vmatprep.subr.bf16.mxu0 %v745
        %791 = vmatpush1.bf16.msra.mxu0 %v742
        %792 = vmatprep.subr.bf16.mxu0 0
        %793 = vmatpush1.bf16.msra.mxu0 0
        %794 = vmatprep.subr.bf16.mxu0 0
        %795 = vmatpush1.bf16.msra.mxu0 0
        %796 = vmatprep.subr.bf16.mxu0 0
        %797 = vmatpush1.bf16.msra.mxu0 0
        %798 = vmatprep.subr.bf16.mxu0 0
        %799 = vmatpush1.bf16.msra.mxu0 0
        %800 = vmatprep.subr.bf16.mxu0 0
        %801 = vmatpush1.bf16.msra.mxu0 0
        %802 = vmatprep.subr.bf16.mxu0 0
        %803 = vmatpush1.bf16.msra.mxu0 0
        %804 = vmatprep.subr.bf16.mxu0 0
        %805 = vmatpush1.bf16.msra.mxu0 0
        %806 = vmatprep.subr.bf16.mxu0 0
        %807 = vmatpush1.bf16.msra.mxu0 0
        %808 = vmatprep.subr.bf16.mxu0 0
        %809 = vmatpush1.bf16.msra.mxu0 0
        %810 = vmatprep.subr.bf16.mxu0 0
        %811 = vmatpush1.bf16.msra.mxu0 0
        %812 = vmatprep.subr.bf16.mxu0 0
        %813 = vmatpush1.bf16.msra.mxu0 0
        %814 = vmatprep.subr.bf16.mxu0 0
        %815 = vmatpush1.bf16.msra.mxu0 0
        %816 = vmatprep.subr.bf16.mxu0 0
        %817 = vmatpush1.bf16.msra.mxu0 0
        %818 = vmatprep.subr.bf16.mxu0 0
        %819 = vmatpush1.bf16.msra.mxu0 0
        %820 = vmatprep.subr.bf16.mxu0 0
        %821 = vmatpush1.bf16.msra.mxu0 0
        %822 = vmatprep.mubr.bf16.mxu0 0
        %823 = vmatmul.mubr.bf16.gmra.mrb[0].mxu0 %v739
        %v824 = vpop.f32.mrb[0].mxu0
        %v825 = vadd.f32 %v782, %v824
        %v826 = vpop.f32.mrb[0].mxu0
        %v827 = vadd.f32 %v784, %v826
        %v828 = vpop.f32.mrb[0].mxu0
        %v829 = vadd.f32 %v786, %v828
        %v830 = vpop.f32.mrb[0].mxu0
        %v831 = vadd.f32 %v788, %v830
        %832 = vdwg.mxu0
        %s833 = scalar_lea.vmem %s176, 528 [#allocation4]
        %v834 = vld [vmem:[%s833] sm:$0xff]
        %v835 = vld [vmem:[%s833 + $0x8] sm:$0xff]
        %v836 = vld [vmem:[%s833 + $0x10] sm:$0xff]
        %v837 = vld [vmem:[%s833 + $0x18] sm:$0xff]
        %v838 = vld [vmem:[%s833 + $0x20] sm:$0xff]
        %v839 = vld [vmem:[%s833 + $0x28] sm:$0xff]
        %v840 = vld [vmem:[%s833 + $0x30] sm:$0xff]
        %v841 = vld [vmem:[%s833 + $0x38] sm:$0xff]
        %v842 = vld [vmem:[%s833 + $0x40] sm:$0xff]
        %v843 = vld [vmem:[%s833 + $0x48] sm:$0xff]
        %v844 = vld [vmem:[%s833 + $0x50] sm:$0xff]
        %v845 = vld [vmem:[%s833 + $0x58] sm:$0xff]
        %v846 = vld [vmem:[%s833 + $0x60] sm:$0xff]
        %v847 = vld [vmem:[%s833 + $0x68] sm:$0xff]
        %v848 = vld [vmem:[%s833 + $0x70] sm:$0xff]
        %v849 = vld [vmem:[%s833 + $0x78] sm:$0xff]
        %v850 = vld [vmem:[%s833 + $0x80] sm:$0xff]
        %v851 = vld [vmem:[%s833 + $0x88] sm:$0xff]
        %v852 = vld [vmem:[%s833 + $0x90] sm:$0xff]
        %v853 = vld [vmem:[%s833 + $0x98] sm:$0xff]
        %v854 = vld [vmem:[%s833 + $0xa0] sm:$0xff]
        %v855 = vld [vmem:[%s833 + $0xa8] sm:$0xff]
        %v856 = vld [vmem:[%s833 + $0xb0] sm:$0xff]
        %v857 = vld [vmem:[%s833 + $0xb8] sm:$0xff]
        %v858 = vld [vmem:[%s833 + $0xc0] sm:$0xff]
        %v859 = vld [vmem:[%s833 + $0xc8] sm:$0xff]
        %v860 = vld [vmem:[%s833 + $0xd0] sm:$0xff]
        %v861 = vld [vmem:[%s833 + $0xd8] sm:$0xff]
        %v862 = vld [vmem:[%s833 + $0xe0] sm:$0xff]
        %v863 = vld [vmem:[%s833 + $0xe8] sm:$0xff]
        %v864 = vld [vmem:[%s833 + $0xf0] sm:$0xff]
        %v865 = vld [vmem:[%s833 + $0xf8] sm:$0xff]
        %v866 = vld [vmem:[%s833 + $0x100] sm:$0x11]
        %v867 = vrot.slane %v282, 1
        %v868 = vrot.slane %v283, 1
        %v869 = vrot.slane %v284, 1
        %v905 = vunpack.c.l.b16 %v834
        %v906 = vunpack.c.h.b16 %v834
        %v907 = vunpack.c.l.b16 %v835
        %v908 = vunpack.c.h.b16 %v835
        %v909 = vunpack.c.l.b16 %v836
        %v910 = vunpack.c.h.b16 %v836
        %v911 = vunpack.c.l.b16 %v837
        %v912 = vunpack.c.h.b16 %v837
        %v913 = vunpack.c.l.b16 %v838
        %v914 = vunpack.c.h.b16 %v838
        %v915 = vunpack.c.l.b16 %v839
        %v916 = vunpack.c.h.b16 %v839
        %v917 = vunpack.c.l.b16 %v840
        %v918 = vunpack.c.h.b16 %v840
        %v919 = vunpack.c.l.b16 %v841
        %v920 = vunpack.c.h.b16 %v841
        %v921 = vunpack.c.l.b16 %v842
        %v922 = vunpack.c.h.b16 %v842
        %v923 = vunpack.c.l.b16 %v843
        %v924 = vunpack.c.h.b16 %v843
        %v925 = vunpack.c.l.b16 %v844
        %v926 = vunpack.c.h.b16 %v844
        %v927 = vunpack.c.l.b16 %v845
        %v928 = vunpack.c.h.b16 %v845
        %v929 = vunpack.c.l.b16 %v846
        %v930 = vunpack.c.h.b16 %v846
        %v931 = vunpack.c.l.b16 %v847
        %v932 = vunpack.c.h.b16 %v847
        %v933 = vunpack.c.l.b16 %v848
        %v934 = vunpack.c.h.b16 %v848
        %v935 = vunpack.c.l.b16 %v849
        %v936 = vunpack.c.h.b16 %v849
        %v937 = vunpack.c.l.b16 %v850
        %v938 = vunpack.c.h.b16 %v850
        %v939 = vunpack.c.l.b16 %v851
        %v940 = vunpack.c.h.b16 %v851
        %v941 = vunpack.c.l.b16 %v852
        %v942 = vunpack.c.h.b16 %v852
        %v943 = vunpack.c.l.b16 %v853
        %v944 = vunpack.c.h.b16 %v853
        %v945 = vunpack.c.l.b16 %v854
        %v946 = vunpack.c.h.b16 %v854
        %v947 = vunpack.c.l.b16 %v855
        %v948 = vunpack.c.h.b16 %v855
        %v949 = vunpack.c.l.b16 %v856
        %v950 = vunpack.c.h.b16 %v856
        %v951 = vunpack.c.l.b16 %v857
        %v952 = vunpack.c.h.b16 %v857
        %v953 = vunpack.c.l.b16 %v858
        %v954 = vunpack.c.h.b16 %v858
        %v955 = vunpack.c.l.b16 %v859
        %v956 = vunpack.c.h.b16 %v859
        %v957 = vunpack.c.l.b16 %v860
        %v958 = vunpack.c.h.b16 %v860
        %v959 = vunpack.c.l.b16 %v861
        %v960 = vunpack.c.h.b16 %v861
        %v961 = vunpack.c.l.b16 %v862
        %v962 = vunpack.c.h.b16 %v862
        %v963 = vunpack.c.l.b16 %v863
        %v964 = vunpack.c.h.b16 %v863
        %v965 = vunpack.c.l.b16 %v864
        %v966 = vunpack.c.h.b16 %v864
        %v967 = vunpack.c.l.b16 %v865
        %v968 = vunpack.c.h.b16 %v865
        %v969 = vunpack.c.l.b16 %v866
        %v970 = vunpack.c.h.b16 %v866
        %v971 = vpack.c.b16 %v907, %v905
        %v972 = vpack.c.b16 %v908, %v906
        %v973 = vpack.c.b16 %v911, %v909
        %v974 = vpack.c.b16 %v912, %v910
        %v975 = vpack.c.b16 %v915, %v913
        %v976 = vpack.c.b16 %v916, %v914
        %v977 = vpack.c.b16 %v919, %v917
        %v978 = vpack.c.b16 %v920, %v918
        %v979 = vpack.c.b16 %v923, %v921
        %v980 = vpack.c.b16 %v924, %v922
        %v981 = vpack.c.b16 %v927, %v925
        %v982 = vpack.c.b16 %v928, %v926
        %v983 = vpack.c.b16 %v931, %v929
        %v984 = vpack.c.b16 %v932, %v930
        %v985 = vpack.c.b16 %v935, %v933
        %v986 = vpack.c.b16 %v936, %v934
        %v987 = vpack.c.b16 %v939, %v937
        %v988 = vpack.c.b16 %v940, %v938
        %v989 = vpack.c.b16 %v943, %v941
        %v990 = vpack.c.b16 %v944, %v942
        %v991 = vpack.c.b16 %v947, %v945
        %v992 = vpack.c.b16 %v948, %v946
        %v993 = vpack.c.b16 %v951, %v949
        %v994 = vpack.c.b16 %v952, %v950
        %v995 = vpack.c.b16 %v955, %v953
        %v996 = vpack.c.b16 %v956, %v954
        %v997 = vpack.c.b16 %v959, %v957
        %v998 = vpack.c.b16 %v960, %v958
        %v999 = vpack.c.b16 %v963, %v961
        %v1000 = vpack.c.b16 %v964, %v962
        %v1001 = vpack.c.b16 %v967, %v965
        %v1002 = vpack.c.b16 %v968, %v966
        %v1003 = vpack.c.b16 %v969, %v969
        %v1004 = vpack.c.b16 %v970, %v970
        %v1038 = vsel %vm473, %v869, 0
        %v1041 = vand.u32 %v1003, %v479
        %v1044 = vand.u32 %v1004, %v479
        %1046 = vmatprep.subr.bf16.mxu0 %v972
        %1047 = vmatpush1.bf16.msra.mxu0 %v971
        %1048 = vmatprep.subr.bf16.mxu0 %v974
        %1049 = vmatpush1.bf16.msra.mxu0 %v973
        %1050 = vmatprep.subr.bf16.mxu0 %v976
        %1051 = vmatpush1.bf16.msra.mxu0 %v975
        %1052 = vmatprep.subr.bf16.mxu0 %v978
        %1053 = vmatpush1.bf16.msra.mxu0 %v977
        %1054 = vmatprep.subr.bf16.mxu0 %v980
        %1055 = vmatpush1.bf16.msra.mxu0 %v979
        %1056 = vmatprep.subr.bf16.mxu0 %v982
        %1057 = vmatpush1.bf16.msra.mxu0 %v981
        %1058 = vmatprep.subr.bf16.mxu0 %v984
        %1059 = vmatpush1.bf16.msra.mxu0 %v983
        %1060 = vmatprep.subr.bf16.mxu0 %v986
        %1061 = vmatpush1.bf16.msra.mxu0 %v985
        %1062 = vmatprep.subr.bf16.mxu0 %v988
        %1063 = vmatpush1.bf16.msra.mxu0 %v987
        %1064 = vmatprep.subr.bf16.mxu0 %v990
        %1065 = vmatpush1.bf16.msra.mxu0 %v989
        %1066 = vmatprep.subr.bf16.mxu0 %v992
        %1067 = vmatpush1.bf16.msra.mxu0 %v991
        %1068 = vmatprep.subr.bf16.mxu0 %v994
        %1069 = vmatpush1.bf16.msra.mxu0 %v993
        %1070 = vmatprep.subr.bf16.mxu0 %v996
        %1071 = vmatpush1.bf16.msra.mxu0 %v995
        %1072 = vmatprep.subr.bf16.mxu0 %v998
        %1073 = vmatpush1.bf16.msra.mxu0 %v997
        %1074 = vmatprep.subr.bf16.mxu0 %v1000
        %1075 = vmatpush1.bf16.msra.mxu0 %v999
        %1076 = vmatprep.subr.bf16.mxu0 %v1002
        %1077 = vmatpush1.bf16.msra.mxu0 %v1001
        %1078 = vmatprep.mubr.bf16.mxu0 %v868
        %1079 = vmatmul.mubr.bf16.gmra.mrb[0].mxu0 %v867
        %v1080 = vpop.f32.mrb[0].mxu0
        %v1081 = vadd.f32 0.0, %v1080
        %v1082 = vpop.f32.mrb[0].mxu0
        %v1083 = vadd.f32 0.0, %v1082
        %v1084 = vpop.f32.mrb[0].mxu0
        %v1085 = vadd.f32 0.0, %v1084
        %v1086 = vpop.f32.mrb[0].mxu0
        %v1087 = vadd.f32 0.0, %v1086
        %1088 = vdwg.mxu0
        %1089 = vmatprep.subr.bf16.mxu0 %v1044
        %1090 = vmatpush1.bf16.msra.mxu0 %v1041
        %1091 = vmatprep.subr.bf16.mxu0 0
        %1092 = vmatpush1.bf16.msra.mxu0 0
        %1093 = vmatprep.subr.bf16.mxu0 0
        %1094 = vmatpush1.bf16.msra.mxu0 0
        %1095 = vmatprep.subr.bf16.mxu0 0
        %1096 = vmatpush1.bf16.msra.mxu0 0
        %1097 = vmatprep.subr.bf16.mxu0 0
        %1098 = vmatpush1.bf16.msra.mxu0 0
        %1099 = vmatprep.subr.bf16.mxu0 0
        %1100 = vmatpush1.bf16.msra.mxu0 0
        %1101 = vmatprep.subr.bf16.mxu0 0
        %1102 = vmatpush1.bf16.msra.mxu0 0
        %1103 = vmatprep.subr.bf16.mxu0 0
        %1104 = vmatpush1.bf16.msra.mxu0 0
        %1105 = vmatprep.subr.bf16.mxu0 0
        %1106 = vmatpush1.bf16.msra.mxu0 0
        %1107 = vmatprep.subr.bf16.mxu0 0
        %1108 = vmatpush1.bf16.msra.mxu0 0
        %1109 = vmatprep.subr.bf16.mxu0 0
        %1110 = vmatpush1.bf16.msra.mxu0 0
        %1111 = vmatprep.subr.bf16.mxu0 0
        %1112 = vmatpush1.bf16.msra.mxu0 0
        %1113 = vmatprep.subr.bf16.mxu0 0
        %1114 = vmatpush1.bf16.msra.mxu0 0
        %1115 = vmatprep.subr.bf16.mxu0 0
        %1116 = vmatpush1.bf16.msra.mxu0 0
        %1117 = vmatprep.subr.bf16.mxu0 0
        %1118 = vmatpush1.bf16.msra.mxu0 0
        %1119 = vmatprep.subr.bf16.mxu0 0
        %1120 = vmatpush1.bf16.msra.mxu0 0
        %1121 = vmatprep.mubr.bf16.mxu0 0
        %1122 = vmatmul.mubr.bf16.gmra.mrb[0].mxu0 %v1038
        %v1123 = vpop.f32.mrb[0].mxu0
        %v1124 = vadd.f32 %v1081, %v1123
        %v1125 = vpop.f32.mrb[0].mxu0
        %v1126 = vadd.f32 %v1083, %v1125
        %v1127 = vpop.f32.mrb[0].mxu0
        %v1128 = vadd.f32 %v1085, %v1127
        %v1129 = vpop.f32.mrb[0].mxu0
        %v1130 = vadd.f32 %v1087, %v1129
        %1131 = vdwg.mxu0
        %v1132 = vadd.f32 %v825, %v1124
        %v1133 = vadd.f32 %v827, %v1126
        %v1134 = vadd.f32 %v829, %v1128
        %v1135 = vadd.f32 %v831, %v1130
        %v1136 = vmax.f32 %v1132, 0.0
        %v1137 = vmax.f32 %v1133, 0.0
        %v1138 = vmax.f32 %v1134, 0.0
        %v1139 = vmax.f32 %v1135, 0.0
        %1140 = vst [vmem:[%s195] sm:$0xff] %v1136
        %1141 = vst [vmem:[%s195 + $0x8] sm:$0xff] %v1137
        %1142 = vst [vmem:[%s195 + $0x10] sm:$0x3f] %v1138
        %1143 = vst [vmem:[%s195 + $0x18] sm:$0x3f] %v1139
        %s1144 = scalar_lea.vmem [#allocation2], 24
        %v1145 = vld [vmem:[%s1144] sm:$0xff]
        %v1146 = vld [vmem:[%s1144 + $0x8] sm:$0xf]
        %v1147 = vld [vmem:[%s1144 + $0xc] sm:$0xff]
        %v1148 = vld [vmem:[%s1144 + $0x14] sm:$0xf]
        %v1149 = vld [vmem:[%s176] sm:$0xff]
        %v1150 = vld [vmem:[%s176 + $0x8] sm:$0xff]
        %v1151 = vld [vmem:[%s176 + $0x10] sm:$0xff]
        %v1152 = vld [vmem:[%s176 + $0x18] sm:$0xff]
        %v1153 = vld [vmem:[%s176 + $0x20] sm:$0xff]
        %v1154 = vld [vmem:[%s176 + $0x28] sm:$0xff]
        %v1155 = vld [vmem:[%s176 + $0x30] sm:$0xff]
        %v1156 = vld [vmem:[%s176 + $0x38] sm:$0xff]
        %v1157 = vld [vmem:[%s176 + $0x40] sm:$0xff]
        %v1158 = vld [vmem:[%s176 + $0x48] sm:$0xff]
        %v1159 = vld [vmem:[%s176 + $0x50] sm:$0xff]
        %v1160 = vld [vmem:[%s176 + $0x58] sm:$0xff]
        %v1161 = vld [vmem:[%s176 + $0x60] sm:$0xff]
        %v1162 = vld [vmem:[%s176 + $0x68] sm:$0xff]
        %v1163 = vld [vmem:[%s176 + $0x70] sm:$0xff]
        %v1164 = vld [vmem:[%s176 + $0x78] sm:$0xff]
        %v1165 = vld [vmem:[%s176 + $0x80] sm:$0xff]
        %v1166 = vld [vmem:[%s176 + $0x88] sm:$0xff]
        %v1167 = vld [vmem:[%s176 + $0x90] sm:$0xff]
        %v1168 = vld [vmem:[%s176 + $0x98] sm:$0xff]
        %v1169 = vld [vmem:[%s176 + $0xa0] sm:$0xff]
        %v1170 = vld [vmem:[%s176 + $0xa8] sm:$0xff]
        %v1171 = vld [vmem:[%s176 + $0xb0] sm:$0xff]
        %v1172 = vld [vmem:[%s176 + $0xb8] sm:$0xff]
        %v1173 = vld [vmem:[%s176 + $0xc0] sm:$0xff]
        %v1174 = vld [vmem:[%s176 + $0xc8] sm:$0xff]
        %v1175 = vld [vmem:[%s176 + $0xd0] sm:$0xff]
        %v1176 = vld [vmem:[%s176 + $0xd8] sm:$0xff]
        %v1177 = vld [vmem:[%s176 + $0xe0] sm:$0xff]
        %v1178 = vld [vmem:[%s176 + $0xe8] sm:$0xff]
        %v1179 = vld [vmem:[%s176 + $0xf0] sm:$0xff]
        %v1180 = vld [vmem:[%s176 + $0xf8] sm:$0xff]
        %v1181 = vld [vmem:[%s176 + $0x100] sm:$0x11]
        %v1182 = vld [vmem:[%s238] sm:$0xff]
        %v1183 = vld [vmem:[%s238 + $0x8] sm:$0xff]
        %v1184 = vld [vmem:[%s238 + $0x10] sm:$0xff]
        %v1185 = vld [vmem:[%s238 + $0x18] sm:$0xff]
        %v1186 = vld [vmem:[%s238 + $0x20] sm:$0xff]
        %v1187 = vld [vmem:[%s238 + $0x28] sm:$0xff]
        %v1188 = vld [vmem:[%s238 + $0x30] sm:$0xff]
        %v1189 = vld [vmem:[%s238 + $0x38] sm:$0xff]
        %v1190 = vld [vmem:[%s238 + $0x40] sm:$0xff]
        %v1191 = vld [vmem:[%s238 + $0x48] sm:$0xff]
        %v1192 = vld [vmem:[%s238 + $0x50] sm:$0xff]
        %v1193 = vld [vmem:[%s238 + $0x58] sm:$0xff]
        %v1194 = vld [vmem:[%s238 + $0x60] sm:$0xff]
        %v1195 = vld [vmem:[%s238 + $0x68] sm:$0xff]
        %v1196 = vld [vmem:[%s238 + $0x70] sm:$0xff]
        %v1197 = vld [vmem:[%s238 + $0x78] sm:$0xff]
        %v1198 = vld [vmem:[%s238 + $0x80] sm:$0xff]
        %v1199 = vld [vmem:[%s238 + $0x88] sm:$0xff]
        %v1200 = vld [vmem:[%s238 + $0x90] sm:$0xff]
        %v1201 = vld [vmem:[%s238 + $0x98] sm:$0xff]
        %v1202 = vld [vmem:[%s238 + $0xa0] sm:$0xff]
        %v1203 = vld [vmem:[%s238 + $0xa8] sm:$0xff]
        %v1204 = vld [vmem:[%s238 + $0xb0] sm:$0xff]
        %v1205 = vld [vmem:[%s238 + $0xb8] sm:$0xff]
        %v1206 = vld [vmem:[%s238 + $0xc0] sm:$0xff]
        %v1207 = vld [vmem:[%s238 + $0xc8] sm:$0xff]
        %v1208 = vld [vmem:[%s238 + $0xd0] sm:$0xff]
        %v1209 = vld [vmem:[%s238 + $0xd8] sm:$0xff]
        %v1210 = vld [vmem:[%s238 + $0xe0] sm:$0xff]
        %v1211 = vld [vmem:[%s238 + $0xe8] sm:$0xff]
        %v1212 = vld [vmem:[%s238 + $0xf0] sm:$0xff]
        %v1213 = vld [vmem:[%s238 + $0xf8] sm:$0xff]
        %v1214 = vld [vmem:[%s238 + $0x100] sm:$0x11]
        %v1219 = vunpack.c.l.b16 %v1145
        %v1220 = vunpack.c.h.b16 %v1145
        %v1221 = vunpack.c.l.b16 %v1146
        %v1222 = vunpack.c.l.b16 %v1147
        %v1223 = vunpack.c.h.b16 %v1147
        %v1224 = vunpack.c.l.b16 %v1148
        %v1225 = vpack.c.b16 %v1222, %v1219
        %v1226 = vpack.c.b16 %v1223, %v1220
        %v1227 = vpack.c.b16 %v1224, %v1221
        %v1229 = vshrl.u32 %v1225, 16
        %v1231 = vshll.u32 %v1225, 16
        %v1233 = vrot.slane %v1231, 1
        %v1234 = vor.u32 %v1229, %v1233
        %v1236 = vshrl.u32 %v1226, 16
        %v1238 = vshll.u32 %v1226, 16
        %v1240 = vrot.slane %v1238, 1
        %v1241 = vor.u32 %v1236, %v1240
        %v1243 = vshrl.u32 %v1227, 16
        %v1245 = vshll.u32 %v1227, 16
        %v1247 = vrot.slane %v1245, 1
        %v1248 = vor.u32 %v1243, %v1247
        %v1284 = vunpack.c.l.b16 %v1182
        %v1285 = vunpack.c.h.b16 %v1182
        %v1286 = vunpack.c.l.b16 %v1183
        %v1287 = vunpack.c.h.b16 %v1183
        %v1288 = vunpack.c.l.b16 %v1184
        %v1289 = vunpack.c.h.b16 %v1184
        %v1290 = vunpack.c.l.b16 %v1185
        %v1291 = vunpack.c.h.b16 %v1185
        %v1292 = vunpack.c.l.b16 %v1186
        %v1293 = vunpack.c.h.b16 %v1186
        %v1294 = vunpack.c.l.b16 %v1187
        %v1295 = vunpack.c.h.b16 %v1187
        %v1296 = vunpack.c.l.b16 %v1188
        %v1297 = vunpack.c.h.b16 %v1188
        %v1298 = vunpack.c.l.b16 %v1189
        %v1299 = vunpack.c.h.b16 %v1189
        %v1300 = vunpack.c.l.b16 %v1190
        %v1301 = vunpack.c.h.b16 %v1190
        %v1302 = vunpack.c.l.b16 %v1191
        %v1303 = vunpack.c.h.b16 %v1191
        %v1304 = vunpack.c.l.b16 %v1192
        %v1305 = vunpack.c.h.b16 %v1192
        %v1306 = vunpack.c.l.b16 %v1193
        %v1307 = vunpack.c.h.b16 %v1193
        %v1308 = vunpack.c.l.b16 %v1194
        %v1309 = vunpack.c.h.b16 %v1194
        %v1310 = vunpack.c.l.b16 %v1195
        %v1311 = vunpack.c.h.b16 %v1195
        %v1312 = vunpack.c.l.b16 %v1196
        %v1313 = vunpack.c.h.b16 %v1196
        %v1314 = vunpack.c.l.b16 %v1197
        %v1315 = vunpack.c.h.b16 %v1197
        %v1316 = vunpack.c.l.b16 %v1198
        %v1317 = vunpack.c.h.b16 %v1198
        %v1318 = vunpack.c.l.b16 %v1199
        %v1319 = vunpack.c.h.b16 %v1199
        %v1320 = vunpack.c.l.b16 %v1200
        %v1321 = vunpack.c.h.b16 %v1200
        %v1322 = vunpack.c.l.b16 %v1201
        %v1323 = vunpack.c.h.b16 %v1201
        %v1324 = vunpack.c.l.b16 %v1202
        %v1325 = vunpack.c.h.b16 %v1202
        %v1326 = vunpack.c.l.b16 %v1203
        %v1327 = vunpack.c.h.b16 %v1203
        %v1328 = vunpack.c.l.b16 %v1204
        %v1329 = vunpack.c.h.b16 %v1204
        %v1330 = vunpack.c.l.b16 %v1205
        %v1331 = vunpack.c.h.b16 %v1205
        %v1332 = vunpack.c.l.b16 %v1206
        %v1333 = vunpack.c.h.b16 %v1206
        %v1334 = vunpack.c.l.b16 %v1207
        %v1335 = vunpack.c.h.b16 %v1207
        %v1336 = vunpack.c.l.b16 %v1208
        %v1337 = vunpack.c.h.b16 %v1208
        %v1338 = vunpack.c.l.b16 %v1209
        %v1339 = vunpack.c.h.b16 %v1209
        %v1340 = vunpack.c.l.b16 %v1210
        %v1341 = vunpack.c.h.b16 %v1210
        %v1342 = vunpack.c.l.b16 %v1211
        %v1343 = vunpack.c.h.b16 %v1211
        %v1344 = vunpack.c.l.b16 %v1212
        %v1345 = vunpack.c.h.b16 %v1212
        %v1346 = vunpack.c.l.b16 %v1213
        %v1347 = vunpack.c.h.b16 %v1213
        %v1348 = vunpack.c.l.b16 %v1214
        %v1349 = vunpack.c.h.b16 %v1214
        %v1350 = vpack.c.b16 %v1286, %v1284
        %v1351 = vpack.c.b16 %v1287, %v1285
        %v1352 = vpack.c.b16 %v1290, %v1288
        %v1353 = vpack.c.b16 %v1291, %v1289
        %v1354 = vpack.c.b16 %v1294, %v1292
        %v1355 = vpack.c.b16 %v1295, %v1293
        %v1356 = vpack.c.b16 %v1298, %v1296
        %v1357 = vpack.c.b16 %v1299, %v1297
        %v1358 = vpack.c.b16 %v1302, %v1300
        %v1359 = vpack.c.b16 %v1303, %v1301
        %v1360 = vpack.c.b16 %v1306, %v1304
        %v1361 = vpack.c.b16 %v1307, %v1305
        %v1362 = vpack.c.b16 %v1310, %v1308
        %v1363 = vpack.c.b16 %v1311, %v1309
        %v1364 = vpack.c.b16 %v1314, %v1312
        %v1365 = vpack.c.b16 %v1315, %v1313
        %v1366 = vpack.c.b16 %v1318, %v1316
        %v1367 = vpack.c.b16 %v1319, %v1317
        %v1368 = vpack.c.b16 %v1322, %v1320
        %v1369 = vpack.c.b16 %v1323, %v1321
        %v1370 = vpack.c.b16 %v1326, %v1324
        %v1371 = vpack.c.b16 %v1327, %v1325
        %v1372 = vpack.c.b16 %v1330, %v1328
        %v1373 = vpack.c.b16 %v1331, %v1329
        %v1374 = vpack.c.b16 %v1334, %v1332
        %v1375 = vpack.c.b16 %v1335, %v1333
        %v1376 = vpack.c.b16 %v1338, %v1336
        %v1377 = vpack.c.b16 %v1339, %v1337
        %v1378 = vpack.c.b16 %v1342, %v1340
        %v1379 = vpack.c.b16 %v1343, %v1341
        %v1380 = vpack.c.b16 %v1346, %v1344
        %v1381 = vpack.c.b16 %v1347, %v1345
        %v1382 = vpack.c.b16 %v1348, %v1348
        %v1383 = vpack.c.b16 %v1349, %v1349
        %v1417 = vsel %vm473, %v1248, 0
        %v1420 = vand.u32 %v1382, %v479
        %v1423 = vand.u32 %v1383, %v479
        %1425 = vmatprep.subr.bf16.mxu0 %v1351
        %1426 = vmatpush1.bf16.msra.mxu0 %v1350
        %1427 = vmatprep.subr.bf16.mxu0 %v1353
        %1428 = vmatpush1.bf16.msra.mxu0 %v1352
        %1429 = vmatprep.subr.bf16.mxu0 %v1355
        %1430 = vmatpush1.bf16.msra.mxu0 %v1354
        %1431 = vmatprep.subr.bf16.mxu0 %v1357
        %1432 = vmatpush1.bf16.msra.mxu0 %v1356
        %1433 = vmatprep.subr.bf16.mxu0 %v1359
        %1434 = vmatpush1.bf16.msra.mxu0 %v1358
        %1435 = vmatprep.subr.bf16.mxu0 %v1361
        %1436 = vmatpush1.bf16.msra.mxu0 %v1360
        %1437 = vmatprep.subr.bf16.mxu0 %v1363
        %1438 = vmatpush1.bf16.msra.mxu0 %v1362
        %1439 = vmatprep.subr.bf16.mxu0 %v1365
        %1440 = vmatpush1.bf16.msra.mxu0 %v1364
        %1441 = vmatprep.subr.bf16.mxu0 %v1367
        %1442 = vmatpush1.bf16.msra.mxu0 %v1366
        %1443 = vmatprep.subr.bf16.mxu0 %v1369
        %1444 = vmatpush1.bf16.msra.mxu0 %v1368
        %1445 = vmatprep.subr.bf16.mxu0 %v1371
        %1446 = vmatpush1.bf16.msra.mxu0 %v1370
        %1447 = vmatprep.subr.bf16.mxu0 %v1373
        %1448 = vmatpush1.bf16.msra.mxu0 %v1372
        %1449 = vmatprep.subr.bf16.mxu0 %v1375
        %1450 = vmatpush1.bf16.msra.mxu0 %v1374
        %1451 = vmatprep.subr.bf16.mxu0 %v1377
        %1452 = vmatpush1.bf16.msra.mxu0 %v1376
        %1453 = vmatprep.subr.bf16.mxu0 %v1379
        %1454 = vmatpush1.bf16.msra.mxu0 %v1378
        %1455 = vmatprep.subr.bf16.mxu0 %v1381
        %1456 = vmatpush1.bf16.msra.mxu0 %v1380
        %1457 = vmatprep.mubr.bf16.mxu0 %v1241
        %1458 = vmatmul.mubr.bf16.gmra.mrb[0].mxu0 %v1234
        %v1459 = vpop.f32.mrb[0].mxu0
        %v1460 = vadd.f32 0.0, %v1459
        %v1461 = vpop.f32.mrb[0].mxu0
        %v1462 = vadd.f32 0.0, %v1461
        %v1463 = vpop.f32.mrb[0].mxu0
        %v1464 = vadd.f32 0.0, %v1463
        %v1465 = vpop.f32.mrb[0].mxu0
        %v1466 = vadd.f32 0.0, %v1465
        %1467 = vdwg.mxu0
        %1468 = vmatprep.subr.bf16.mxu0 %v1423
        %1469 = vmatpush1.bf16.msra.mxu0 %v1420
        %1470 = vmatprep.subr.bf16.mxu0 0
        %1471 = vmatpush1.bf16.msra.mxu0 0
        %1472 = vmatprep.subr.bf16.mxu0 0
        %1473 = vmatpush1.bf16.msra.mxu0 0
        %1474 = vmatprep.subr.bf16.mxu0 0
        %1475 = vmatpush1.bf16.msra.mxu0 0
        %1476 = vmatprep.subr.bf16.mxu0 0
        %1477 = vmatpush1.bf16.msra.mxu0 0
        %1478 = vmatprep.subr.bf16.mxu0 0
        %1479 = vmatpush1.bf16.msra.mxu0 0
        %1480 = vmatprep.subr.bf16.mxu0 0
        %1481 = vmatpush1.bf16.msra.mxu0 0
        %1482 = vmatprep.subr.bf16.mxu0 0
        %1483 = vmatpush1.bf16.msra.mxu0 0
        %1484 = vmatprep.subr.bf16.mxu0 0
        %1485 = vmatpush1.bf16.msra.mxu0 0
        %1486 = vmatprep.subr.bf16.mxu0 0
        %1487 = vmatpush1.bf16.msra.mxu0 0
        %1488 = vmatprep.subr.bf16.mxu0 0
        %1489 = vmatpush1.bf16.msra.mxu0 0
        %1490 = vmatprep.subr.bf16.mxu0 0
        %1491 = vmatpush1.bf16.msra.mxu0 0
        %1492 = vmatprep.subr.bf16.mxu0 0
        %1493 = vmatpush1.bf16.msra.mxu0 0
        %1494 = vmatprep.subr.bf16.mxu0 0
        %1495 = vmatpush1.bf16.msra.mxu0 0
        %1496 = vmatprep.subr.bf16.mxu0 0
        %1497 = vmatpush1.bf16.msra.mxu0 0
        %1498 = vmatprep.subr.bf16.mxu0 0
        %1499 = vmatpush1.bf16.msra.mxu0 0
        %1500 = vmatprep.mubr.bf16.mxu0 0
        %1501 = vmatmul.mubr.bf16.gmra.mrb[0].mxu0 %v1417
        %v1502 = vpop.f32.mrb[0].mxu0
        %v1503 = vadd.f32 %v1460, %v1502
        %v1504 = vpop.f32.mrb[0].mxu0
        %v1505 = vadd.f32 %v1462, %v1504
        %v1506 = vpop.f32.mrb[0].mxu0
        %v1507 = vadd.f32 %v1464, %v1506
        %v1508 = vpop.f32.mrb[0].mxu0
        %v1509 = vadd.f32 %v1466, %v1508
        %1510 = vdwg.mxu0
        %v1546 = vunpack.c.l.b16 %v1149
        %v1547 = vunpack.c.h.b16 %v1149
        %v1548 = vunpack.c.l.b16 %v1150
        %v1549 = vunpack.c.h.b16 %v1150
        %v1550 = vunpack.c.l.b16 %v1151
        %v1551 = vunpack.c.h.b16 %v1151
        %v1552 = vunpack.c.l.b16 %v1152
        %v1553 = vunpack.c.h.b16 %v1152
        %v1554 = vunpack.c.l.b16 %v1153
        %v1555 = vunpack.c.h.b16 %v1153
        %v1556 = vunpack.c.l.b16 %v1154
        %v1557 = vunpack.c.h.b16 %v1154
        %v1558 = vunpack.c.l.b16 %v1155
        %v1559 = vunpack.c.h.b16 %v1155
        %v1560 = vunpack.c.l.b16 %v1156
        %v1561 = vunpack.c.h.b16 %v1156
        %v1562 = vunpack.c.l.b16 %v1157
        %v1563 = vunpack.c.h.b16 %v1157
        %v1564 = vunpack.c.l.b16 %v1158
        %v1565 = vunpack.c.h.b16 %v1158
        %v1566 = vunpack.c.l.b16 %v1159
        %v1567 = vunpack.c.h.b16 %v1159
        %v1568 = vunpack.c.l.b16 %v1160
        %v1569 = vunpack.c.h.b16 %v1160
        %v1570 = vunpack.c.l.b16 %v1161
        %v1571 = vunpack.c.h.b16 %v1161
        %v1572 = vunpack.c.l.b16 %v1162
        %v1573 = vunpack.c.h.b16 %v1162
        %v1574 = vunpack.c.l.b16 %v1163
        %v1575 = vunpack.c.h.b16 %v1163
        %v1576 = vunpack.c.l.b16 %v1164
        %v1577 = vunpack.c.h.b16 %v1164
        %v1578 = vunpack.c.l.b16 %v1165
        %v1579 = vunpack.c.h.b16 %v1165
        %v1580 = vunpack.c.l.b16 %v1166
        %v1581 = vunpack.c.h.b16 %v1166
        %v1582 = vunpack.c.l.b16 %v1167
        %v1583 = vunpack.c.h.b16 %v1167
        %v1584 = vunpack.c.l.b16 %v1168
        %v1585 = vunpack.c.h.b16 %v1168
        %v1586 = vunpack.c.l.b16 %v1169
        %v1587 = vunpack.c.h.b16 %v1169
        %v1588 = vunpack.c.l.b16 %v1170
        %v1589 = vunpack.c.h.b16 %v1170
        %v1590 = vunpack.c.l.b16 %v1171
        %v1591 = vunpack.c.h.b16 %v1171
        %v1592 = vunpack.c.l.b16 %v1172
        %v1593 = vunpack.c.h.b16 %v1172
        %v1594 = vunpack.c.l.b16 %v1173
        %v1595 = vunpack.c.h.b16 %v1173
        %v1596 = vunpack.c.l.b16 %v1174
        %v1597 = vunpack.c.h.b16 %v1174
        %v1598 = vunpack.c.l.b16 %v1175
        %v1599 = vunpack.c.h.b16 %v1175
        %v1600 = vunpack.c.l.b16 %v1176
        %v1601 = vunpack.c.h.b16 %v1176
        %v1602 = vunpack.c.l.b16 %v1177
        %v1603 = vunpack.c.h.b16 %v1177
        %v1604 = vunpack.c.l.b16 %v1178
        %v1605 = vunpack.c.h.b16 %v1178
        %v1606 = vunpack.c.l.b16 %v1179
        %v1607 = vunpack.c.h.b16 %v1179
        %v1608 = vunpack.c.l.b16 %v1180
        %v1609 = vunpack.c.h.b16 %v1180
        %v1610 = vunpack.c.l.b16 %v1181
        %v1611 = vunpack.c.h.b16 %v1181
        %v1612 = vpack.c.b16 %v1548, %v1546
        %v1613 = vpack.c.b16 %v1549, %v1547
        %v1614 = vpack.c.b16 %v1552, %v1550
        %v1615 = vpack.c.b16 %v1553, %v1551
        %v1616 = vpack.c.b16 %v1556, %v1554
        %v1617 = vpack.c.b16 %v1557, %v1555
        %v1618 = vpack.c.b16 %v1560, %v1558
        %v1619 = vpack.c.b16 %v1561, %v1559
        %v1620 = vpack.c.b16 %v1564, %v1562
        %v1621 = vpack.c.b16 %v1565, %v1563
        %v1622 = vpack.c.b16 %v1568, %v1566
        %v1623 = vpack.c.b16 %v1569, %v1567
        %v1624 = vpack.c.b16 %v1572, %v1570
        %v1625 = vpack.c.b16 %v1573, %v1571
        %v1626 = vpack.c.b16 %v1576, %v1574
        %v1627 = vpack.c.b16 %v1577, %v1575
        %v1628 = vpack.c.b16 %v1580, %v1578
        %v1629 = vpack.c.b16 %v1581, %v1579
        %v1630 = vpack.c.b16 %v1584, %v1582
        %v1631 = vpack.c.b16 %v1585, %v1583
        %v1632 = vpack.c.b16 %v1588, %v1586
        %v1633 = vpack.c.b16 %v1589, %v1587
        %v1634 = vpack.c.b16 %v1592, %v1590
        %v1635 = vpack.c.b16 %v1593, %v1591
        %v1636 = vpack.c.b16 %v1596, %v1594
        %v1637 = vpack.c.b16 %v1597, %v1595
        %v1638 = vpack.c.b16 %v1600, %v1598
        %v1639 = vpack.c.b16 %v1601, %v1599
        %v1640 = vpack.c.b16 %v1604, %v1602
        %v1641 = vpack.c.b16 %v1605, %v1603
        %v1642 = vpack.c.b16 %v1608, %v1606
        %v1643 = vpack.c.b16 %v1609, %v1607
        %v1644 = vpack.c.b16 %v1610, %v1610
        %v1645 = vpack.c.b16 %v1611, %v1611
        %v1678 = vsel %vm473, %v1227, 0
        %v1681 = vand.u32 %v1644, %v479
        %v1684 = vand.u32 %v1645, %v479
        %1686 = vmatprep.subr.bf16.mxu0 %v1613
        %1687 = vmatpush1.bf16.msra.mxu0 %v1612
        %1688 = vmatprep.subr.bf16.mxu0 %v1615
        %1689 = vmatpush1.bf16.msra.mxu0 %v1614
        %1690 = vmatprep.subr.bf16.mxu0 %v1617
        %1691 = vmatpush1.bf16.msra.mxu0 %v1616
        %1692 = vmatprep.subr.bf16.mxu0 %v1619
        %1693 = vmatpush1.bf16.msra.mxu0 %v1618
        %1694 = vmatprep.subr.bf16.mxu0 %v1621
        %1695 = vmatpush1.bf16.msra.mxu0 %v1620
        %1696 = vmatprep.subr.bf16.mxu0 %v1623
        %1697 = vmatpush1.bf16.msra.mxu0 %v1622
        %1698 = vmatprep.subr.bf16.mxu0 %v1625
        %1699 = vmatpush1.bf16.msra.mxu0 %v1624
        %1700 = vmatprep.subr.bf16.mxu0 %v1627
        %1701 = vmatpush1.bf16.msra.mxu0 %v1626
        %1702 = vmatprep.subr.bf16.mxu0 %v1629
        %1703 = vmatpush1.bf16.msra.mxu0 %v1628
        %1704 = vmatprep.subr.bf16.mxu0 %v1631
        %1705 = vmatpush1.bf16.msra.mxu0 %v1630
        %1706 = vmatprep.subr.bf16.mxu0 %v1633
        %1707 = vmatpush1.bf16.msra.mxu0 %v1632
        %1708 = vmatprep.subr.bf16.mxu0 %v1635
        %1709 = vmatpush1.bf16.msra.mxu0 %v1634
        %1710 = vmatprep.subr.bf16.mxu0 %v1637
        %1711 = vmatpush1.bf16.msra.mxu0 %v1636
        %1712 = vmatprep.subr.bf16.mxu0 %v1639
        %1713 = vmatpush1.bf16.msra.mxu0 %v1638
        %1714 = vmatprep.subr.bf16.mxu0 %v1641
        %1715 = vmatpush1.bf16.msra.mxu0 %v1640
        %1716 = vmatprep.subr.bf16.mxu0 %v1643
        %1717 = vmatpush1.bf16.msra.mxu0 %v1642
        %1718 = vmatprep.mubr.bf16.mxu0 %v1226
        %1719 = vmatmul.mubr.bf16.gmra.mrb[0].mxu0 %v1225
        %v1720 = vpop.f32.mrb[0].mxu0
        %v1721 = vadd.f32 %v1503, %v1720
        %v1722 = vpop.f32.mrb[0].mxu0
        %v1723 = vadd.f32 %v1505, %v1722
        %v1724 = vpop.f32.mrb[0].mxu0
        %v1725 = vadd.f32 %v1507, %v1724
        %v1726 = vpop.f32.mrb[0].mxu0
        %v1727 = vadd.f32 %v1509, %v1726
        %1728 = vdwg.mxu0
        %1729 = vmatprep.subr.bf16.mxu0 %v1684
        %1730 = vmatpush1.bf16.msra.mxu0 %v1681
        %1731 = vmatprep.subr.bf16.mxu0 0
        %1732 = vmatpush1.bf16.msra.mxu0 0
        %1733 = vmatprep.subr.bf16.mxu0 0
        %1734 = vmatpush1.bf16.msra.mxu0 0
        %1735 = vmatprep.subr.bf16.mxu0 0
        %1736 = vmatpush1.bf16.msra.mxu0 0
        %1737 = vmatprep.subr.bf16.mxu0 0
        %1738 = vmatpush1.bf16.msra.mxu0 0
        %1739 = vmatprep.subr.bf16.mxu0 0
        %1740 = vmatpush1.bf16.msra.mxu0 0
        %1741 = vmatprep.subr.bf16.mxu0 0
        %1742 = vmatpush1.bf16.msra.mxu0 0
        %1743 = vmatprep.subr.bf16.mxu0 0
        %1744 = vmatpush1.bf16.msra.mxu0 0
        %1745 = vmatprep.subr.bf16.mxu0 0
        %1746 = vmatpush1.bf16.msra.mxu0 0
        %1747 = vmatprep.subr.bf16.mxu0 0
        %1748 = vmatpush1.bf16.msra.mxu0 0
        %1749 = vmatprep.subr.bf16.mxu0 0
        %1750 = vmatpush1.bf16.msra.mxu0 0
        %1751 = vmatprep.subr.bf16.mxu0 0
        %1752 = vmatpush1.bf16.msra.mxu0 0
        %1753 = vmatprep.subr.bf16.mxu0 0
        %1754 = vmatpush1.bf16.msra.mxu0 0
        %1755 = vmatprep.subr.bf16.mxu0 0
        %1756 = vmatpush1.bf16.msra.mxu0 0
        %1757 = vmatprep.subr.bf16.mxu0 0
        %1758 = vmatpush1.bf16.msra.mxu0 0
        %1759 = vmatprep.subr.bf16.mxu0 0
        %1760 = vmatpush1.bf16.msra.mxu0 0
        %1761 = vmatprep.mubr.bf16.mxu0 0
        %1762 = vmatmul.mubr.bf16.gmra.mrb[0].mxu0 %v1678
        %v1763 = vpop.f32.mrb[0].mxu0
        %v1764 = vadd.f32 %v1721, %v1763
        %v1765 = vpop.f32.mrb[0].mxu0
        %v1766 = vadd.f32 %v1723, %v1765
        %v1767 = vpop.f32.mrb[0].mxu0
        %v1768 = vadd.f32 %v1725, %v1767
        %v1769 = vpop.f32.mrb[0].mxu0
        %v1770 = vadd.f32 %v1727, %v1769
        %1771 = vdwg.mxu0
        %v1772 = vld [vmem:[%s833] sm:$0xff]
        %v1773 = vld [vmem:[%s833 + $0x8] sm:$0xff]
        %v1774 = vld [vmem:[%s833 + $0x10] sm:$0xff]
        %v1775 = vld [vmem:[%s833 + $0x18] sm:$0xff]
        %v1776 = vld [vmem:[%s833 + $0x20] sm:$0xff]
        %v1777 = vld [vmem:[%s833 + $0x28] sm:$0xff]
        %v1778 = vld [vmem:[%s833 + $0x30] sm:$0xff]
        %v1779 = vld [vmem:[%s833 + $0x38] sm:$0xff]
        %v1780 = vld [vmem:[%s833 + $0x40] sm:$0xff]
        %v1781 = vld [vmem:[%s833 + $0x48] sm:$0xff]
        %v1782 = vld [vmem:[%s833 + $0x50] sm:$0xff]
        %v1783 = vld [vmem:[%s833 + $0x58] sm:$0xff]
        %v1784 = vld [vmem:[%s833 + $0x60] sm:$0xff]
        %v1785 = vld [vmem:[%s833 + $0x68] sm:$0xff]
        %v1786 = vld [vmem:[%s833 + $0x70] sm:$0xff]
        %v1787 = vld [vmem:[%s833 + $0x78] sm:$0xff]
        %v1788 = vld [vmem:[%s833 + $0x80] sm:$0xff]
        %v1789 = vld [vmem:[%s833 + $0x88] sm:$0xff]
        %v1790 = vld [vmem:[%s833 + $0x90] sm:$0xff]
        %v1791 = vld [vmem:[%s833 + $0x98] sm:$0xff]
        %v1792 = vld [vmem:[%s833 + $0xa0] sm:$0xff]
        %v1793 = vld [vmem:[%s833 + $0xa8] sm:$0xff]
        %v1794 = vld [vmem:[%s833 + $0xb0] sm:$0xff]
        %v1795 = vld [vmem:[%s833 + $0xb8] sm:$0xff]
        %v1796 = vld [vmem:[%s833 + $0xc0] sm:$0xff]
        %v1797 = vld [vmem:[%s833 + $0xc8] sm:$0xff]
        %v1798 = vld [vmem:[%s833 + $0xd0] sm:$0xff]
        %v1799 = vld [vmem:[%s833 + $0xd8] sm:$0xff]
        %v1800 = vld [vmem:[%s833 + $0xe0] sm:$0xff]
        %v1801 = vld [vmem:[%s833 + $0xe8] sm:$0xff]
        %v1802 = vld [vmem:[%s833 + $0xf0] sm:$0xff]
        %v1803 = vld [vmem:[%s833 + $0xf8] sm:$0xff]
        %v1804 = vld [vmem:[%s833 + $0x100] sm:$0x11]
        %v1805 = vrot.slane %v1225, 1
        %v1806 = vrot.slane %v1226, 1
        %v1807 = vrot.slane %v1227, 1
        %v1843 = vunpack.c.l.b16 %v1772
        %v1844 = vunpack.c.h.b16 %v1772
        %v1845 = vunpack.c.l.b16 %v1773
        %v1846 = vunpack.c.h.b16 %v1773
        %v1847 = vunpack.c.l.b16 %v1774
        %v1848 = vunpack.c.h.b16 %v1774
        %v1849 = vunpack.c.l.b16 %v1775
        %v1850 = vunpack.c.h.b16 %v1775
        %v1851 = vunpack.c.l.b16 %v1776
        %v1852 = vunpack.c.h.b16 %v1776
        %v1853 = vunpack.c.l.b16 %v1777
        %v1854 = vunpack.c.h.b16 %v1777
        %v1855 = vunpack.c.l.b16 %v1778
        %v1856 = vunpack.c.h.b16 %v1778
        %v1857 = vunpack.c.l.b16 %v1779
        %v1858 = vunpack.c.h.b16 %v1779
        %v1859 = vunpack.c.l.b16 %v1780
        %v1860 = vunpack.c.h.b16 %v1780
        %v1861 = vunpack.c.l.b16 %v1781
        %v1862 = vunpack.c.h.b16 %v1781
        %v1863 = vunpack.c.l.b16 %v1782
        %v1864 = vunpack.c.h.b16 %v1782
        %v1865 = vunpack.c.l.b16 %v1783
        %v1866 = vunpack.c.h.b16 %v1783
        %v1867 = vunpack.c.l.b16 %v1784
        %v1868 = vunpack.c.h.b16 %v1784
        %v1869 = vunpack.c.l.b16 %v1785
        %v1870 = vunpack.c.h.b16 %v1785
        %v1871 = vunpack.c.l.b16 %v1786
        %v1872 = vunpack.c.h.b16 %v1786
        %v1873 = vunpack.c.l.b16 %v1787
        %v1874 = vunpack.c.h.b16 %v1787
        %v1875 = vunpack.c.l.b16 %v1788
        %v1876 = vunpack.c.h.b16 %v1788
        %v1877 = vunpack.c.l.b16 %v1789
        %v1878 = vunpack.c.h.b16 %v1789
        %v1879 = vunpack.c.l.b16 %v1790
        %v1880 = vunpack.c.h.b16 %v1790
        %v1881 = vunpack.c.l.b16 %v1791
        %v1882 = vunpack.c.h.b16 %v1791
        %v1883 = vunpack.c.l.b16 %v1792
        %v1884 = vunpack.c.h.b16 %v1792
        %v1885 = vunpack.c.l.b16 %v1793
        %v1886 = vunpack.c.h.b16 %v1793
        %v1887 = vunpack.c.l.b16 %v1794
        %v1888 = vunpack.c.h.b16 %v1794
        %v1889 = vunpack.c.l.b16 %v1795
        %v1890 = vunpack.c.h.b16 %v1795
        %v1891 = vunpack.c.l.b16 %v1796
        %v1892 = vunpack.c.h.b16 %v1796
        %v1893 = vunpack.c.l.b16 %v1797
        %v1894 = vunpack.c.h.b16 %v1797
        %v1895 = vunpack.c.l.b16 %v1798
        %v1896 = vunpack.c.h.b16 %v1798
        %v1897 = vunpack.c.l.b16 %v1799
        %v1898 = vunpack.c.h.b16 %v1799
        %v1899 = vunpack.c.l.b16 %v1800
        %v1900 = vunpack.c.h.b16 %v1800
        %v1901 = vunpack.c.l.b16 %v1801
        %v1902 = vunpack.c.h.b16 %v1801
        %v1903 = vunpack.c.l.b16 %v1802
        %v1904 = vunpack.c.h.b16 %v1802
        %v1905 = vunpack.c.l.b16 %v1803
        %v1906 = vunpack.c.h.b16 %v1803
        %v1907 = vunpack.c.l.b16 %v1804
        %v1908 = vunpack.c.h.b16 %v1804
        %v1909 = vpack.c.b16 %v1845, %v1843
        %v1910 = vpack.c.b16 %v1846, %v1844
        %v1911 = vpack.c.b16 %v1849, %v1847
        %v1912 = vpack.c.b16 %v1850, %v1848
        %v1913 = vpack.c.b16 %v1853, %v1851
        %v1914 = vpack.c.b16 %v1854, %v1852
        %v1915 = vpack.c.b16 %v1857, %v1855
        %v1916 = vpack.c.b16 %v1858, %v1856
        %v1917 = vpack.c.b16 %v1861, %v1859
        %v1918 = vpack.c.b16 %v1862, %v1860
        %v1919 = vpack.c.b16 %v1865, %v1863
        %v1920 = vpack.c.b16 %v1866, %v1864
        %v1921 = vpack.c.b16 %v1869, %v1867
        %v1922 = vpack.c.b16 %v1870, %v1868
        %v1923 = vpack.c.b16 %v1873, %v1871
        %v1924 = vpack.c.b16 %v1874, %v1872
        %v1925 = vpack.c.b16 %v1877, %v1875
        %v1926 = vpack.c.b16 %v1878, %v1876
        %v1927 = vpack.c.b16 %v1881, %v1879
        %v1928 = vpack.c.b16 %v1882, %v1880
        %v1929 = vpack.c.b16 %v1885, %v1883
        %v1930 = vpack.c.b16 %v1886, %v1884
        %v1931 = vpack.c.b16 %v1889, %v1887
        %v1932 = vpack.c.b16 %v1890, %v1888
        %v1933 = vpack.c.b16 %v1893, %v1891
        %v1934 = vpack.c.b16 %v1894, %v1892
        %v1935 = vpack.c.b16 %v1897, %v1895
        %v1936 = vpack.c.b16 %v1898, %v1896
        %v1937 = vpack.c.b16 %v1901, %v1899
        %v1938 = vpack.c.b16 %v1902, %v1900
        %v1939 = vpack.c.b16 %v1905, %v1903
        %v1940 = vpack.c.b16 %v1906, %v1904
        %v1941 = vpack.c.b16 %v1907, %v1907
        %v1942 = vpack.c.b16 %v1908, %v1908
        %v1976 = vsel %vm473, %v1807, 0
        %v1979 = vand.u32 %v1941, %v479
        %v1982 = vand.u32 %v1942, %v479
        %1984 = vmatprep.subr.bf16.mxu0 %v1910
        %1985 = vmatpush1.bf16.msra.mxu0 %v1909
        %1986 = vmatprep.subr.bf16.mxu0 %v1912
        %1987 = vmatpush1.bf16.msra.mxu0 %v1911
        %1988 = vmatprep.subr.bf16.mxu0 %v1914
        %1989 = vmatpush1.bf16.msra.mxu0 %v1913
        %1990 = vmatprep.subr.bf16.mxu0 %v1916
        %1991 = vmatpush1.bf16.msra.mxu0 %v1915
        %1992 = vmatprep.subr.bf16.mxu0 %v1918
        %1993 = vmatpush1.bf16.msra.mxu0 %v1917
        %1994 = vmatprep.subr.bf16.mxu0 %v1920
        %1995 = vmatpush1.bf16.msra.mxu0 %v1919
        %1996 = vmatprep.subr.bf16.mxu0 %v1922
        %1997 = vmatpush1.bf16.msra.mxu0 %v1921
        %1998 = vmatprep.subr.bf16.mxu0 %v1924
        %1999 = vmatpush1.bf16.msra.mxu0 %v1923
        %2000 = vmatprep.subr.bf16.mxu0 %v1926
        %2001 = vmatpush1.bf16.msra.mxu0 %v1925
        %2002 = vmatprep.subr.bf16.mxu0 %v1928
        %2003 = vmatpush1.bf16.msra.mxu0 %v1927
        %2004 = vmatprep.subr.bf16.mxu0 %v1930
        %2005 = vmatpush1.bf16.msra.mxu0 %v1929
        %2006 = vmatprep.subr.bf16.mxu0 %v1932
        %2007 = vmatpush1.bf16.msra.mxu0 %v1931
        %2008 = vmatprep.subr.bf16.mxu0 %v1934
        %2009 = vmatpush1.bf16.msra.mxu0 %v1933
        %2010 = vmatprep.subr.bf16.mxu0 %v1936
        %2011 = vmatpush1.bf16.msra.mxu0 %v1935
        %2012 = vmatprep.subr.bf16.mxu0 %v1938
        %2013 = vmatpush1.bf16.msra.mxu0 %v1937
        %2014 = vmatprep.subr.bf16.mxu0 %v1940
        %2015 = vmatpush1.bf16.msra.mxu0 %v1939
        %2016 = vmatprep.mubr.bf16.mxu0 %v1806
        %2017 = vmatmul.mubr.bf16.gmra.mrb[0].mxu0 %v1805
        %v2018 = vpop.f32.mrb[0].mxu0
        %v2019 = vadd.f32 0.0, %v2018
        %v2020 = vpop.f32.mrb[0].mxu0
        %v2021 = vadd.f32 0.0, %v2020
        %v2022 = vpop.f32.mrb[0].mxu0
        %v2023 = vadd.f32 0.0, %v2022
        %v2024 = vpop.f32.mrb[0].mxu0
        %v2025 = vadd.f32 0.0, %v2024
        %2026 = vdwg.mxu0
        %2027 = vmatprep.subr.bf16.mxu0 %v1982
        %2028 = vmatpush1.bf16.msra.mxu0 %v1979
        %2029 = vmatprep.subr.bf16.mxu0 0
        %2030 = vmatpush1.bf16.msra.mxu0 0
        %2031 = vmatprep.subr.bf16.mxu0 0
        %2032 = vmatpush1.bf16.msra.mxu0 0
        %2033 = vmatprep.subr.bf16.mxu0 0
        %2034 = vmatpush1.bf16.msra.mxu0 0
        %2035 = vmatprep.subr.bf16.mxu0 0
        %2036 = vmatpush1.bf16.msra.mxu0 0
        %2037 = vmatprep.subr.bf16.mxu0 0
        %2038 = vmatpush1.bf16.msra.mxu0 0
        %2039 = vmatprep.subr.bf16.mxu0 0
        %2040 = vmatpush1.bf16.msra.mxu0 0
        %2041 = vmatprep.subr.bf16.mxu0 0
        %2042 = vmatpush1.bf16.msra.mxu0 0
        %2043 = vmatprep.subr.bf16.mxu0 0
        %2044 = vmatpush1.bf16.msra.mxu0 0
        %2045 = vmatprep.subr.bf16.mxu0 0
        %2046 = vmatpush1.bf16.msra.mxu0 0
        %2047 = vmatprep.subr.bf16.mxu0 0
        %2048 = vmatpush1.bf16.msra.mxu0 0
        %2049 = vmatprep.subr.bf16.mxu0 0
        %2050 = vmatpush1.bf16.msra.mxu0 0
        %2051 = vmatprep.subr.bf16.mxu0 0
        %2052 = vmatpush1.bf16.msra.mxu0 0
        %2053 = vmatprep.subr.bf16.mxu0 0
        %2054 = vmatpush1.bf16.msra.mxu0 0
        %2055 = vmatprep.subr.bf16.mxu0 0
        %2056 = vmatpush1.bf16.msra.mxu0 0
        %2057 = vmatprep.subr.bf16.mxu0 0
        %2058 = vmatpush1.bf16.msra.mxu0 0
        %2059 = vmatprep.mubr.bf16.mxu0 0
        %2060 = vmatmul.mubr.bf16.gmra.mrb[0].mxu0 %v1976
        %v2061 = vpop.f32.mrb[0].mxu0
        %v2062 = vadd.f32 %v2019, %v2061
        %v2063 = vpop.f32.mrb[0].mxu0
        %v2064 = vadd.f32 %v2021, %v2063
        %v2065 = vpop.f32.mrb[0].mxu0
        %v2066 = vadd.f32 %v2023, %v2065
        %v2067 = vpop.f32.mrb[0].mxu0
        %v2068 = vadd.f32 %v2025, %v2067
        %2069 = vdwg.mxu0
        %v2070 = vadd.f32 %v1764, %v2062
        %v2071 = vadd.f32 %v1766, %v2064
        %v2072 = vadd.f32 %v1768, %v2066
        %v2073 = vadd.f32 %v1770, %v2068
        %v2074 = vmax.f32 %v2070, 0.0
        %v2075 = vmax.f32 %v2071, 0.0
        %v2076 = vmax.f32 %v2072, 0.0
        %v2077 = vmax.f32 %v2073, 0.0
        %s2078 = scalar_lea.vmem %s195, 32 [#allocation6]
        %2079 = vst [vmem:[%s2078] sm:$0xff] %v2074
        %2080 = vst [vmem:[%s2078 + $0x8] sm:$0xff] %v2075
        %2081 = vst [vmem:[%s2078 + $0x10] sm:$0x3f] %v2076
        %2082 = vst [vmem:[%s2078 + $0x18] sm:$0x3f] %v2077
        %s2083 = sand.u32 %s91, 1
        %s2084 = sand.u32 %s91, 1
        %s2085 = smul.addr %s2084, 64
        %s2086 = scalar_lea.vmem [#allocation6], %s2085
        // Predicated region
        $region37: #{tpu_custom_call.1} parent=27 // pred_check
          %p2087 = pneg %p101
        $region38: #{tpu_custom_call.1} parent=27 // pred_check_branch
          %2089 = sbr.rel (%p2087) target = $region40
        $region39: #{tpu_custom_call.1} parent=27 // pred_region
          %s2090 = smul.u32 2, %s21
          %s2091 = smul.u32 2, %s22
          %s2092 = smul.addr %s2090, 8
          %s2093 = sadd.s32 %s2091, %s2092
          %s2094 = smul.addr %s2093, 8
          %s2095 = scalar_lea.vmem %s2, %s2094
          // Predicated region
          $region41: #{tpu_custom_call.1} parent=39 // pred_check
            _
          $region42: #{tpu_custom_call.1} parent=39 // pred_check_branch
            %2097 = sbr.rel (0) target = $region44
          $region43: #{tpu_custom_call.1} parent=39 // pred_region
            // Predicated region
            $region45: #{tpu_custom_call.1} parent=43 // pred_check
              _
            $region46: #{tpu_custom_call.1} parent=43 // pred_check_branch
              %2099 = sbr.rel (0) target = $region48
            $region47: #{tpu_custom_call.1} parent=43 // pred_region
              loop: start=0, step=1, limit=1
              $region49: #{tpu_custom_call.1} parent=47 // loop_pre_header
                _
              $region50: #{tpu_custom_call.1} parent=47 // loop_header
                %s2101 = sphi 0, %s2105
                %p2102 = scmp.ge.s32.totalorder %s2101, 1
                %s2106 = sphi %s2086, %s2086
                %s2107 = sphi %s2095, %s2095
              $region51: #{tpu_custom_call.1} parent=47 // loop_header_branch
                %2104 = sbr.rel (%p2102) target = $region55
              $region52: #{tpu_custom_call.1} parent=47 // loop_body
                %v2108 = vld [vmem:[%s2106] sm:$0xff]
                %2109 = vst [vmem:[%s2107] sm:$0xff] %v2108
                %v2110 = vld [vmem:[%s2106 + $0x8] sm:$0xff]
                %2111 = vst [vmem:[%s2107 + $0x8] sm:$0xff] %v2110
                %v2112 = vld [vmem:[%s2106 + $0x10] sm:$0xff]
                %2113 = vst [vmem:[%s2107 + $0x20] sm:$0xff] %v2112
                %v2114 = vld [vmem:[%s2106 + $0x18] sm:$0xff]
                %2115 = vst [vmem:[%s2107 + $0x28] sm:$0xff] %v2114
                %v2116 = vld [vmem:[%s2106 + $0x20] sm:$0xff]
                %2117 = vst [vmem:[%s2107 + $0x40] sm:$0xff] %v2116
                %v2118 = vld [vmem:[%s2106 + $0x28] sm:$0xff]
                %2119 = vst [vmem:[%s2107 + $0x48] sm:$0xff] %v2118
                %v2120 = vld [vmem:[%s2106 + $0x30] sm:$0xff]
                %2121 = vst [vmem:[%s2107 + $0x60] sm:$0xff] %v2120
                %v2122 = vld [vmem:[%s2106 + $0x38] sm:$0xff]
                %2123 = vst [vmem:[%s2107 + $0x68] sm:$0xff] %v2122
              $region53: #{tpu_custom_call.1} parent=47 // loop_footer
                %s2105 = sadd.s32 1, %s2101
              $region54: #{tpu_custom_call.1} parent=47 // loop_footer_branch
                %2100 = sbr.rel target = $region50
              $region55: #{tpu_custom_call.1} parent=47 // loop_exit
                _
            $region48: #{tpu_custom_call.1} parent=43 // pred_fallthru
              _
            // Predicated region
            $region56: #{tpu_custom_call.1} parent=43 // pred_check
              _
            $region57: #{tpu_custom_call.1} parent=43 // pred_check_branch
              %2125 = sbr.rel target = $region59
            $region58: #{tpu_custom_call.1} parent=43 // pred_region
              _
            $region59: #{tpu_custom_call.1} parent=43 // pred_fallthru
              _
          $region44: #{tpu_custom_call.1} parent=39 // pred_fallthru
            _
          %2126 = vnop
        $region40: #{tpu_custom_call.1} parent=27 // pred_fallthru
          _
      $region28: #{tpu_custom_call.1} parent=5 // pred_fallthru
        _
      %p2127 = scmp.le.s32.totalorder 2, %s12
      // Predicated region
      $region60: #{tpu_custom_call.1} parent=5 // pred_check
        %p2128 = pneg %p2127
      $region61: #{tpu_custom_call.1} parent=5 // pred_check_branch
        %2130 = sbr.rel (%p2128) target = $region63
      $region62: #{tpu_custom_call.1} parent=5 // pred_region
        %s2131 = ssub.s32 %s12, 2
        // Predicated region
        $region64: #{tpu_custom_call.1} parent=62 // pred_check
          %p2132 = pneg %p107
        $region65: #{tpu_custom_call.1} parent=62 // pred_check_branch
          %2134 = sbr.rel (%p2132) target = $region67
        $region66: #{tpu_custom_call.1} parent=62 // pred_region
          %s2135 = sand.u32 %s92, 1
          %s2136 = sand.u32 %s92, 1
          %s2137 = smul.addr %s2136, 64
          %s2138 = scalar_lea.vmem [#allocation6], %s2137
        $region67: #{tpu_custom_call.1} parent=62 // pred_fallthru
          _
      $region63: #{tpu_custom_call.1} parent=5 // pred_fallthru
        _
    $region6: #{tpu_custom_call.1} parent=1 // loop_footer
      %s16 = sadd.s32 1, %s12
    $region7: #{tpu_custom_call.1} parent=1 // loop_footer_branch
      %11 = sbr.rel target = $region3
    $region8: #{tpu_custom_call.1} parent=1 // loop_exit
      _
    %2139 = vsyncpa [#allocation3], 1
    %s2140 = scalar_lea.sflag [#allocation3], 1
    %2141 = vsyncpa %s2140, 1
    %2142 = vsyncpa [#allocation5], 1
    %s2143 = scalar_lea.sflag [#allocation5], 1
    %2144 = vsyncpa %s2143, 1

</llo_original>
